<compile_context>
chip_gen: v7x
topology: tpu7x:2x2x1
jax: 0.10.0
libtpu: 0.0.40
codegen_flags: <defaults>
</compile_context>

<pallas_src>
import jax
import jax.numpy as jnp
from jax.experimental import pallas as pl
from jax.experimental.pallas import tpu as pltpu

N, CIN, H, W = 1, 1600, 7, 7
CMID, COUT = 128, 32
P = N * H * W              # 49 pixels
EPS = 1e-5
HALO = 8                   # max |dy*W + dx| for a 3x3 tap on a W=7 row-major image
PADW = P + 2 * HALO        # 65-wide flattened activation buffer with zero halos

_VMEM = pl.BlockSpec(memory_space=pltpu.MemorySpace.VMEM)


def fused_kernel(x_ref, w1_ref, gamma_ref, beta_ref, w2_ref, o_ref, apad_ref):
    # x_ref:      (CIN, P)        = (1600, 49)  f32, channel-major input pixels
    # w1_ref:     (CMID, CIN)     = (128, 1600) bf16, 1x1 conv weight (OI layout)
    # gamma/beta: (CMID, 1)       f32
    # w2_ref:     (9, COUT, CMID) = (9, 32, 128) bf16, taps ordered (ky*3+kx, co, ci)
    # o_ref:      (COUT, P)       = (32, 49)    f32, channel-major output pixels
    # apad_ref:   (CMID, PADW)    = (128, 65)   bf16 scratch: zero-halo flattened act.

    # ---- stage 1: 1x1 conv == one channel-major MXU matmul (bf16 ops, f32 acc) ----
    x_bf = x_ref[...].astype(jnp.bfloat16)                              # (CIN, P)
    y = jnp.dot(w1_ref[...], x_bf, preferred_element_type=jnp.float32)  # (CMID, P) f32

    # ---- BatchNorm2d: training-mode (biased) batch stats, one pass over y ----
    inv_p = jnp.float32(1.0 / P)
    s1 = jnp.sum(y, axis=1, keepdims=True)                              # (CMID, 1)
    s2 = jnp.sum(y * y, axis=1, keepdims=True)                          # (CMID, 1)
    mean = s1 * inv_p
    var = s2 * inv_p - mean * mean
    scale = gamma_ref[...] * jax.lax.rsqrt(var + EPS)                   # (CMID, 1)
    shift = beta_ref[...] - mean * scale
    a = jnp.maximum(y * scale + shift, 0.0)                             # (CMID, P) f32

    # ---- stash ReLU output (bf16) into the zero-halo flattened buffer ----
    # apad column j holds flattened pixel (j - HALO); columns outside [HALO, HALO+P)
    # are zero and implement the padding=1 rows above/below the image.
    apad_ref[...] = jnp.zeros((CMID, PADW), jnp.bfloat16)
    apad_ref[:, HALO:HALO + P] = a.astype(jnp.bfloat16)

    # Column-validity masks (zero-padding at the left/right image borders).
    col = jax.lax.broadcasted_iota(jnp.int32, (1, P), 1) % W            # (1, P)
    mask_l = (col >= 1).astype(jnp.float32)        # tap dx = -1 reads column c-1
    mask_r = (col <= W - 2).astype(jnp.float32)    # tap dx = +1 reads column c+1

    # ---- stage 2: 3x3 conv as 9 shifted channel-major matmuls, f32 accumulator ----
    acc = None
    for ky in range(3):
        for kx in range(3):
            dy, dx = ky - 1, kx - 1
            start = HALO + dy * W + dx                                  # static, 0..16
            patch = apad_ref[:, start:start + P]                        # (CMID, P) bf16
            contrib = jnp.dot(w2_ref[3 * ky + kx], patch,
                              preferred_element_type=jnp.float32)       # (COUT, P) f32
            if dx == -1:
                contrib = contrib * mask_l
            elif dx == 1:
                contrib = contrib * mask_r
            acc = contrib if acc is None else acc + contrib
    o_ref[...] = acc


def prepare_params(w1, gamma, beta, w2):
    """One-time weight/param layout + dtype prep, hoisted out of the per-call path."""
    w1_mat = w1.reshape(CMID, CIN).astype(jnp.bfloat16)                   # (128, 1600)
    # (co, ci, ky, kx) -> (ky*3+kx, co, ci)
    w2_taps = jnp.transpose(w2, (2, 3, 0, 1)).reshape(9, COUT, CMID).astype(jnp.bfloat16)
    return (w1_mat,
            gamma.reshape(CMID, 1).astype(jnp.float32),
            beta.reshape(CMID, 1).astype(jnp.float32),
            w2_taps)


def model_forward(x_nchw, w1_mat, gamma_c, beta_c, w2_taps):
    """x_nchw: (1, 1600, 7, 7) f32 -> (1, 32, 7, 7) f32. Single fused pallas_call."""
    n, cin, h, w = x_nchw.shape
    assert n == 1, "reshape below is the NCHW->(C, N*H*W) view only for N == 1"
    x_mat = x_nchw.reshape(cin, n * h * w)          # free reshape (no XLA transpose)
    out = pl.pallas_call(
        fused_kernel,
        out_shape=jax.ShapeDtypeStruct((COUT, n * h * w), jnp.float32),
        in_specs=[_VMEM, _VMEM, _VMEM, _VMEM, _VMEM],
        out_specs=_VMEM,
        scratch_shapes=[
            pltpu.VMEM((CMID, PADW), jnp.bfloat16),   # zero-halo flattened activation
        ],
    )(x_mat, w1_mat, gamma_c, beta_c, w2_taps)
    # channel-major (COUT, P) -> NCHW is a free reshape
    return out.reshape(n, COUT, h, w)


def reference_forward(x_nchw, w1, gamma, beta, w2, mm_dtype=jnp.float32):
    """Pure-JAX reference matching the PyTorch forward (BN in training mode).

    mm_dtype controls the matmul-operand precision so the same function serves
    both as the exact-f32 semantic reference and as a bf16-operand structural
    reference matching the kernel's precision path.
    """
    y = jax.lax.conv_general_dilated(
        x_nchw.astype(mm_dtype), w1.astype(mm_dtype), (1, 1), "VALID",
        dimension_numbers=("NCHW", "OIHW", "NCHW"),
        preferred_element_type=jnp.float32)
    mean = jnp.mean(y, axis=(0, 2, 3), keepdims=True)
    var = jnp.mean(jnp.square(y - mean), axis=(0, 2, 3), keepdims=True)
    y = (y - mean) * jax.lax.rsqrt(var + EPS)
    y = y * gamma.reshape(1, -1, 1, 1) + beta.reshape(1, -1, 1, 1)
    y = jnp.maximum(y, 0.0)
    return jax.lax.conv_general_dilated(
        y.astype(mm_dtype), w2.astype(mm_dtype), (1, 1), ((1, 1), (1, 1)),
        dimension_numbers=("NCHW", "OIHW", "NCHW"),
        preferred_element_type=jnp.float32)


if __name__ == "__main__":
    key = jax.random.PRNGKey(0)
    kx, kw1, kw2 = jax.random.split(key, 3)

    x582 = jax.random.normal(kx, (N, CIN, H, W), dtype=jnp.float32)
    w1 = jax.random.normal(kw1, (CMID, CIN, 1, 1), dtype=jnp.float32) * 0.02
    w2 = jax.random.normal(kw2, (COUT, CMID, 3, 3), dtype=jnp.float32) * 0.05
    gamma = jnp.ones((CMID,), dtype=jnp.float32)   # BatchNorm2d default init
    beta = jnp.zeros((CMID,), dtype=jnp.float32)

    # One-time parameter layout/dtype prep (outside the per-call jitted path).
    params = prepare_params(w1, gamma, beta, w2)

    fwd = jax.jit(model_forward)
    out = jax.block_until_ready(fwd(x582, *params))
    assert out.shape == (N, COUT, H, W), out.shape

    # Structural check vs. a reference that uses the same bf16-operand / f32-acc
    # precision path as the kernel (tight tolerance).
    ref_bf16 = jax.block_until_ready(
        reference_forward(x582, w1, gamma, beta, w2, mm_dtype=jnp.bfloat16))
    assert jnp.allclose(out, ref_bf16, atol=3e-3, rtol=3e-3), \
        float(jnp.max(jnp.abs(out - ref_bf16)))

    # Semantic check vs. the exact-f32 module; looser tolerance accounts for the
    # intentional bf16 MXU operands (accumulation and BN math remain f32).
    ref_f32 = jax.block_until_ready(
        reference_forward(x582, w1, gamma, beta, w2, mm_dtype=jnp.float32))
    assert jnp.allclose(out, ref_f32, atol=5e-2, rtol=5e-2), \
        float(jnp.max(jnp.abs(out - ref_f32)))

    print("KERNEL_OK")
</pallas_src>

<mosaic_0001>
module attributes {stable_mosaic.version = 11 : i64} {
  func.func @fused_kernel(%arg0: memref<1600x49xf32, #tpu.memory_space<vmem>>, %arg1: memref<128x1600xbf16, #tpu.memory_space<vmem>>, %arg2: memref<128x1xf32, #tpu.memory_space<vmem>>, %arg3: memref<128x1xf32, #tpu.memory_space<vmem>>, %arg4: memref<9x32x128xbf16, #tpu.memory_space<vmem>>, %arg5: memref<32x49xf32, #tpu.memory_space<vmem>>, %arg6: memref<128x65xbf16, #tpu.memory_space<vmem>>) attributes {dimension_semantics = [], scalar_prefetch = 0 : i64, scratch_operands = 1 : i64, tpu.core_type = #tpu.core_type<tc>} {
    %c0 = arith.constant 0 : index
    %c0_0 = arith.constant 0 : index
    %0 = vector.load %arg0[%c0, %c0_0] : memref<1600x49xf32, #tpu.memory_space<vmem>>, vector<1600x49xf32>
    %1 = arith.truncf %0 : vector<1600x49xf32> to vector<1600x49xbf16>
    %c0_1 = arith.constant 0 : index
    %c0_2 = arith.constant 0 : index
    %2 = vector.load %arg1[%c0_1, %c0_2] : memref<128x1600xbf16, #tpu.memory_space<vmem>>, vector<128x1600xbf16>
    %cst = arith.constant dense<0.000000e+00> : vector<128x49xf32>
    %3 = tpu.matmul %2, %1, %cst {dimension_numbers = #tpu.dot_dimension_numbers<[1], [0], [0], [1], [0, 0, 1, 1], [], []>} : vector<128x1600xbf16>, vector<1600x49xbf16>, vector<128x49xf32> -> vector<128x49xf32>
    %cst_3 = arith.constant dense<0.000000e+00> : vector<128xf32>
    %4 = vector.multi_reduction <add>, %3, %cst_3 [1] : vector<128x49xf32> to vector<128xf32>
    %5 = vector.shape_cast %4 : vector<128xf32> to vector<128x1xf32>
    %6 = arith.mulf %3, %3 : vector<128x49xf32>
    %cst_4 = arith.constant dense<0.000000e+00> : vector<128xf32>
    %7 = vector.multi_reduction <add>, %6, %cst_4 [1] : vector<128x49xf32> to vector<128xf32>
    %8 = vector.shape_cast %7 : vector<128xf32> to vector<128x1xf32>
    %cst_5 = arith.constant 0.0204081628 : f32
    %9 = vector.broadcast %cst_5 : f32 to vector<128x1xf32>
    %10 = arith.mulf %5, %9 : vector<128x1xf32>
    %cst_6 = arith.constant 0.0204081628 : f32
    %11 = vector.broadcast %cst_6 : f32 to vector<128x1xf32>
    %12 = arith.mulf %8, %11 : vector<128x1xf32>
    %13 = arith.mulf %10, %10 : vector<128x1xf32>
    %14 = arith.subf %12, %13 : vector<128x1xf32>
    %c0_7 = arith.constant 0 : index
    %c0_8 = arith.constant 0 : index
    %15 = vector.load %arg2[%c0_7, %c0_8] : memref<128x1xf32, #tpu.memory_space<vmem>>, vector<128x1xf32>
    %cst_9 = arith.constant 9.99999974E-6 : f32
    %16 = vector.broadcast %cst_9 : f32 to vector<128x1xf32>
    %17 = arith.addf %14, %16 : vector<128x1xf32>
    %18 = math.rsqrt %17 : vector<128x1xf32>
    %19 = arith.mulf %15, %18 : vector<128x1xf32>
    %c0_10 = arith.constant 0 : index
    %c0_11 = arith.constant 0 : index
    %20 = vector.load %arg3[%c0_10, %c0_11] : memref<128x1xf32, #tpu.memory_space<vmem>>, vector<128x1xf32>
    %21 = arith.mulf %10, %19 : vector<128x1xf32>
    %22 = arith.subf %20, %21 : vector<128x1xf32>
    %23 = vector.broadcast %19 : vector<128x1xf32> to vector<128x49xf32>
    %24 = arith.mulf %3, %23 : vector<128x49xf32>
    %25 = vector.broadcast %22 : vector<128x1xf32> to vector<128x49xf32>
    %26 = arith.addf %24, %25 : vector<128x49xf32>
    %cst_12 = arith.constant 0.000000e+00 : f32
    %27 = vector.broadcast %cst_12 : f32 to vector<128x49xf32>
    %28 = arith.maximumf %26, %27 : vector<128x49xf32>
    %cst_13 = arith.constant 0.000000e+00 : bf16
    %29 = vector.broadcast %cst_13 : bf16 to vector<128x65xbf16>
    %c0_14 = arith.constant 0 : index
    %c0_15 = arith.constant 0 : index
    %30 = vector.load %arg6[%c0_14, %c0_15] : memref<128x65xbf16, #tpu.memory_space<vmem>>, vector<128x65xbf16>
    tpu.vector_store %arg6[%c0_14, %c0_15], %29 {strides = array<i32>} : memref<128x65xbf16, #tpu.memory_space<vmem>>, vector<128x65xbf16>,
    %31 = arith.truncf %28 : vector<128x49xf32> to vector<128x49xbf16>
    %c0_16 = arith.constant 0 : index
    %c8 = arith.constant 8 : index
    %32 = vector.load %arg6[%c0_16, %c8] : memref<128x65xbf16, #tpu.memory_space<vmem>>, vector<128x49xbf16>
    tpu.vector_store %arg6[%c0_16, %c8], %31 {strides = array<i32>} : memref<128x65xbf16, #tpu.memory_space<vmem>>, vector<128x49xbf16>,
    %33 = tpu.iota {dimensions = array<i32: 1>} : vector<1x49xi32>
    %c7_i32 = arith.constant 7 : i32
    %c0_i32 = arith.constant 0 : i32
    %34 = arith.cmpi eq, %c7_i32, %c0_i32 : i32
    %c1_i32 = arith.constant 1 : i32
    %35 = arith.select %34, %c1_i32, %c7_i32 : i32
    %36 = vector.broadcast %35 : i32 to vector<1x49xi32>
    %37 = arith.remsi %33, %36 : vector<1x49xi32>
    %c0_i32_17 = arith.constant 0 : i32
    %38 = vector.broadcast %c0_i32_17 : i32 to vector<1x49xi32>
    %39 = arith.cmpi ne, %37, %38 : vector<1x49xi32>
    %c0_i32_18 = arith.constant 0 : i32
    %40 = vector.broadcast %c0_i32_18 : i32 to vector<1x49xi32>
    %41 = arith.cmpi slt, %37, %40 : vector<1x49xi32>
    %c0_i32_19 = arith.constant 0 : i32
    %42 = arith.cmpi slt, %35, %c0_i32_19 : i32
    %43 = vector.broadcast %42 : i1 to vector<1x49xi1>
    %44 = vector.broadcast %43 : vector<1x49xi1> to vector<1x49xi1>
    %45 = arith.xori %41, %44 : vector<1x49xi1>
    %46 = arith.andi %45, %39 : vector<1x49xi1>
    %47 = vector.broadcast %35 : i32 to vector<1x49xi32>
    %48 = arith.addi %37, %47 : vector<1x49xi32>
    %49 = arith.select %46, %48, %37 : vector<1x49xi1>, vector<1x49xi32>
    %c1_i32_20 = arith.constant 1 : i32
    %50 = vector.broadcast %c1_i32_20 : i32 to vector<1x49xi32>
    %51 = arith.cmpi sge, %49, %50 : vector<1x49xi32>
    %52 = arith.extui %51 : vector<1x49xi1> to vector<1x49xi32>
    %53 = arith.sitofp %52 : vector<1x49xi32> to vector<1x49xf32>
    %c5_i32 = arith.constant 5 : i32
    %54 = vector.broadcast %c5_i32 : i32 to vector<1x49xi32>
    %55 = arith.cmpi sle, %49, %54 : vector<1x49xi32>
    %56 = arith.extui %55 : vector<1x49xi1> to vector<1x49xi32>
    %57 = arith.sitofp %56 : vector<1x49xi32> to vector<1x49xf32>
    %c0_21 = arith.constant 0 : index
    %c0_22 = arith.constant 0 : index
    %58 = vector.load %arg6[%c0_21, %c0_22] : memref<128x65xbf16, #tpu.memory_space<vmem>>, vector<128x49xbf16>
    %c0_23 = arith.constant 0 : index
    %c0_24 = arith.constant 0 : index
    %c0_25 = arith.constant 0 : index
    %59 = vector.load %arg4[%c0_23, %c0_24, %c0_25] : memref<9x32x128xbf16, #tpu.memory_space<vmem>>, vector<1x32x128xbf16>
    %60 = vector.shape_cast %59 : vector<1x32x128xbf16> to vector<32x128xbf16>
    %cst_26 = arith.constant dense<0.000000e+00> : vector<32x49xf32>
    %61 = tpu.matmul %60, %58, %cst_26 {dimension_numbers = #tpu.dot_dimension_numbers<[1], [0], [0], [1], [0, 0, 1, 1], [], []>} : vector<32x128xbf16>, vector<128x49xbf16>, vector<32x49xf32> -> vector<32x49xf32>
    %62 = vector.broadcast %53 : vector<1x49xf32> to vector<32x49xf32>
    %63 = arith.mulf %61, %62 : vector<32x49xf32>
    %c0_27 = arith.constant 0 : index
    %c1 = arith.constant 1 : index
    %64 = vector.load %arg6[%c0_27, %c1] : memref<128x65xbf16, #tpu.memory_space<vmem>>, vector<128x49xbf16>
    %c1_28 = arith.constant 1 : index
    %c0_29 = arith.constant 0 : index
    %c0_30 = arith.constant 0 : index
    %65 = vector.load %arg4[%c1_28, %c0_29, %c0_30] : memref<9x32x128xbf16, #tpu.memory_space<vmem>>, vector<1x32x128xbf16>
    %66 = vector.shape_cast %65 : vector<1x32x128xbf16> to vector<32x128xbf16>
    %cst_31 = arith.constant dense<0.000000e+00> : vector<32x49xf32>
    %67 = tpu.matmul %66, %64, %cst_31 {dimension_numbers = #tpu.dot_dimension_numbers<[1], [0], [0], [1], [0, 0, 1, 1], [], []>} : vector<32x128xbf16>, vector<128x49xbf16>, vector<32x49xf32> -> vector<32x49xf32>
    %68 = arith.addf %63, %67 : vector<32x49xf32>
    %c0_32 = arith.constant 0 : index
    %c2 = arith.constant 2 : index
    %69 = vector.load %arg6[%c0_32, %c2] : memref<128x65xbf16, #tpu.memory_space<vmem>>, vector<128x49xbf16>
    %c2_33 = arith.constant 2 : index
    %c0_34 = arith.constant 0 : index
    %c0_35 = arith.constant 0 : index
    %70 = vector.load %arg4[%c2_33, %c0_34, %c0_35] : memref<9x32x128xbf16, #tpu.memory_space<vmem>>, vector<1x32x128xbf16>
    %71 = vector.shape_cast %70 : vector<1x32x128xbf16> to vector<32x128xbf16>
    %cst_36 = arith.constant dense<0.000000e+00> : vector<32x49xf32>
    %72 = tpu.matmul %71, %69, %cst_36 {dimension_numbers = #tpu.dot_dimension_numbers<[1], [0], [0], [1], [0, 0, 1, 1], [], []>} : vector<32x128xbf16>, vector<128x49xbf16>, vector<32x49xf32> -> vector<32x49xf32>
    %73 = vector.broadcast %57 : vector<1x49xf32> to vector<32x49xf32>
    %74 = arith.mulf %72, %73 : vector<32x49xf32>
    %75 = arith.addf %68, %74 : vector<32x49xf32>
    %c0_37 = arith.constant 0 : index
    %c7 = arith.constant 7 : index
    %76 = vector.load %arg6[%c0_37, %c7] : memref<128x65xbf16, #tpu.memory_space<vmem>>, vector<128x49xbf16>
    %c3 = arith.constant 3 : index
    %c0_38 = arith.constant 0 : index
    %c0_39 = arith.constant 0 : index
    %77 = vector.load %arg4[%c3, %c0_38, %c0_39] : memref<9x32x128xbf16, #tpu.memory_space<vmem>>, vector<1x32x128xbf16>
    %78 = vector.shape_cast %77 : vector<1x32x128xbf16> to vector<32x128xbf16>
    %cst_40 = arith.constant dense<0.000000e+00> : vector<32x49xf32>
    %79 = tpu.matmul %78, %76, %cst_40 {dimension_numbers = #tpu.dot_dimension_numbers<[1], [0], [0], [1], [0, 0, 1, 1], [], []>} : vector<32x128xbf16>, vector<128x49xbf16>, vector<32x49xf32> -> vector<32x49xf32>
    %80 = vector.broadcast %53 : vector<1x49xf32> to vector<32x49xf32>
    %81 = arith.mulf %79, %80 : vector<32x49xf32>
    %82 = arith.addf %75, %81 : vector<32x49xf32>
    %c0_41 = arith.constant 0 : index
    %c8_42 = arith.constant 8 : index
    %83 = vector.load %arg6[%c0_41, %c8_42] : memref<128x65xbf16, #tpu.memory_space<vmem>>, vector<128x49xbf16>
    %c4 = arith.constant 4 : index
    %c0_43 = arith.constant 0 : index
    %c0_44 = arith.constant 0 : index
    %84 = vector.load %arg4[%c4, %c0_43, %c0_44] : memref<9x32x128xbf16, #tpu.memory_space<vmem>>, vector<1x32x128xbf16>
    %85 = vector.shape_cast %84 : vector<1x32x128xbf16> to vector<32x128xbf16>
    %cst_45 = arith.constant dense<0.000000e+00> : vector<32x49xf32>
    %86 = tpu.matmul %85, %83, %cst_45 {dimension_numbers = #tpu.dot_dimension_numbers<[1], [0], [0], [1], [0, 0, 1, 1], [], []>} : vector<32x128xbf16>, vector<128x49xbf16>, vector<32x49xf32> -> vector<32x49xf32>
    %87 = arith.addf %82, %86 : vector<32x49xf32>
    %c0_46 = arith.constant 0 : index
    %c9 = arith.constant 9 : index
    %88 = vector.load %arg6[%c0_46, %c9] : memref<128x65xbf16, #tpu.memory_space<vmem>>, vector<128x49xbf16>
    %c5 = arith.constant 5 : index
    %c0_47 = arith.constant 0 : index
    %c0_48 = arith.constant 0 : index
    %89 = vector.load %arg4[%c5, %c0_47, %c0_48] : memref<9x32x128xbf16, #tpu.memory_space<vmem>>, vector<1x32x128xbf16>
    %90 = vector.shape_cast %89 : vector<1x32x128xbf16> to vector<32x128xbf16>
    %cst_49 = arith.constant dense<0.000000e+00> : vector<32x49xf32>
    %91 = tpu.matmul %90, %88, %cst_49 {dimension_numbers = #tpu.dot_dimension_numbers<[1], [0], [0], [1], [0, 0, 1, 1], [], []>} : vector<32x128xbf16>, vector<128x49xbf16>, vector<32x49xf32> -> vector<32x49xf32>
    %92 = vector.broadcast %57 : vector<1x49xf32> to vector<32x49xf32>
    %93 = arith.mulf %91, %92 : vector<32x49xf32>
    %94 = arith.addf %87, %93 : vector<32x49xf32>
    %c0_50 = arith.constant 0 : index
    %c14 = arith.constant 14 : index
    %95 = vector.load %arg6[%c0_50, %c14] : memref<128x65xbf16, #tpu.memory_space<vmem>>, vector<128x49xbf16>
    %c6 = arith.constant 6 : index
    %c0_51 = arith.constant 0 : index
    %c0_52 = arith.constant 0 : index
    %96 = vector.load %arg4[%c6, %c0_51, %c0_52] : memref<9x32x128xbf16, #tpu.memory_space<vmem>>, vector<1x32x128xbf16>
    %97 = vector.shape_cast %96 : vector<1x32x128xbf16> to vector<32x128xbf16>
    %cst_53 = arith.constant dense<0.000000e+00> : vector<32x49xf32>
    %98 = tpu.matmul %97, %95, %cst_53 {dimension_numbers = #tpu.dot_dimension_numbers<[1], [0], [0], [1], [0, 0, 1, 1], [], []>} : vector<32x128xbf16>, vector<128x49xbf16>, vector<32x49xf32> -> vector<32x49xf32>
    %99 = vector.broadcast %53 : vector<1x49xf32> to vector<32x49xf32>
    %100 = arith.mulf %98, %99 : vector<32x49xf32>
    %101 = arith.addf %94, %100 : vector<32x49xf32>
    %c0_54 = arith.constant 0 : index
    %c15 = arith.constant 15 : index
    %102 = vector.load %arg6[%c0_54, %c15] : memref<128x65xbf16, #tpu.memory_space<vmem>>, vector<128x49xbf16>
    %c7_55 = arith.constant 7 : index
    %c0_56 = arith.constant 0 : index
    %c0_57 = arith.constant 0 : index
    %103 = vector.load %arg4[%c7_55, %c0_56, %c0_57] : memref<9x32x128xbf16, #tpu.memory_space<vmem>>, vector<1x32x128xbf16>
    %104 = vector.shape_cast %103 : vector<1x32x128xbf16> to vector<32x128xbf16>
    %cst_58 = arith.constant dense<0.000000e+00> : vector<32x49xf32>
    %105 = tpu.matmul %104, %102, %cst_58 {dimension_numbers = #tpu.dot_dimension_numbers<[1], [0], [0], [1], [0, 0, 1, 1], [], []>} : vector<32x128xbf16>, vector<128x49xbf16>, vector<32x49xf32> -> vector<32x49xf32>
    %106 = arith.addf %101, %105 : vector<32x49xf32>
    %c0_59 = arith.constant 0 : index
    %c16 = arith.constant 16 : index
    %107 = vector.load %arg6[%c0_59, %c16] : memref<128x65xbf16, #tpu.memory_space<vmem>>, vector<128x49xbf16>
    %c8_60 = arith.constant 8 : index
    %c0_61 = arith.constant 0 : index
    %c0_62 = arith.constant 0 : index
    %108 = vector.load %arg4[%c8_60, %c0_61, %c0_62] : memref<9x32x128xbf16, #tpu.memory_space<vmem>>, vector<1x32x128xbf16>
    %109 = vector.shape_cast %108 : vector<1x32x128xbf16> to vector<32x128xbf16>
    %cst_63 = arith.constant dense<0.000000e+00> : vector<32x49xf32>
    %110 = tpu.matmul %109, %107, %cst_63 {dimension_numbers = #tpu.dot_dimension_numbers<[1], [0], [0], [1], [0, 0, 1, 1], [], []>} : vector<32x128xbf16>, vector<128x49xbf16>, vector<32x49xf32> -> vector<32x49xf32>
    %111 = vector.broadcast %57 : vector<1x49xf32> to vector<32x49xf32>
    %112 = arith.mulf %110, %111 : vector<32x49xf32>
    %113 = arith.addf %106, %112 : vector<32x49xf32>
    %c0_64 = arith.constant 0 : index
    %c0_65 = arith.constant 0 : index
    %114 = vector.load %arg5[%c0_64, %c0_65] : memref<32x49xf32, #tpu.memory_space<vmem>>, vector<32x49xf32>
    tpu.vector_store %arg5[%c0_64, %c0_65], %113 {strides = array<i32>} : memref<32x49xf32, #tpu.memory_space<vmem>>, vector<32x49xf32>,
    return
  }
}

</mosaic_0001>

<llo_original>
// kernel: model_forward.1
$region0: #{model_forward.1}
  #allocation0 [shape = 'u32[]', space=smem, size = 0x4, offset = 0x4, fixed_abs, tag = 'smem constant byte address 0x4 - core index']
  #allocation1 [shape = 'u32[144,128]{1,0:T(1,128)}', space=vmem, size = 0x12000, scoped, tag = 'internal scratch']
  #allocation2 [shape = 'bf16[128,65]{1,0:T(16,128)(2,1)}', space=vmem, size = 0x8000, scoped, tag = 'scratch operand']
  %s0 = inlined_call_operand.vmem [shape: f32[1600,49], index: 0, kind: input, shape index: {}]
  %s1 = inlined_call_operand.vmem [shape: bf16[128,1600], index: 1, kind: input, shape index: {}]
  %s2 = inlined_call_operand.vmem [shape: f32[128,1], index: 2, kind: input, shape index: {}]
  %s3 = inlined_call_operand.vmem [shape: f32[128,1], index: 3, kind: input, shape index: {}]
  %s4 = inlined_call_operand.vmem [shape: bf16[9,32,128], index: 4, kind: input, shape index: {}]
  %s5 = inlined_call_operand.vmem [shape: f32[32,49], index: 5, kind: output, shape index: {}]
  %s6 = sld [smem:[#allocation0]]
  $region30: #{model_forward.1} parent=0
    _
  %s8 = ssub.s32 1, %s6
  %s9 = scalar_select 0, %s8, %s6
  // Predicated region
  $region2: #{model_forward.1} parent=0 // pred_check
    _
  $region3: #{model_forward.1} parent=0 // pred_check_branch
    %11 = sbr.rel (0) target = $region5
  $region4: #{model_forward.1} parent=0 // pred_region
    _
  $region5: #{model_forward.1} parent=0 // pred_fallthru
    _
  // Predicated region
  $region6: #{model_forward.1} parent=0 // pred_check
    _
  $region7: #{model_forward.1} parent=0 // pred_check_branch
    %13 = sbr.rel (0) target = $region9
  $region8: #{model_forward.1} parent=0 // pred_region
    _
  $region9: #{model_forward.1} parent=0 // pred_fallthru
    _
  // Predicated region
  $region10: #{model_forward.1} parent=0 // pred_check
    _
  $region11: #{model_forward.1} parent=0 // pred_check_branch
    %15 = sbr.rel (0) target = $region13
  $region12: #{model_forward.1} parent=0 // pred_region
    _
  $region13: #{model_forward.1} parent=0 // pred_fallthru
    _
  // Predicated region
  $region14: #{model_forward.1} parent=0 // pred_check
    _
  $region15: #{model_forward.1} parent=0 // pred_check_branch
    %17 = sbr.rel (0) target = $region17
  $region16: #{model_forward.1} parent=0 // pred_region
    _
  $region17: #{model_forward.1} parent=0 // pred_fallthru
    _
  // Predicated region
  $region18: #{model_forward.1} parent=0 // pred_check
    _
  $region19: #{model_forward.1} parent=0 // pred_check_branch
    %19 = sbr.rel (0) target = $region21
  $region20: #{model_forward.1} parent=0 // pred_region
    _
  $region21: #{model_forward.1} parent=0 // pred_fallthru
    _
  %v21 = vld [vmem:[%s0] sm:$0xff]
  %v22 = vld [vmem:[%s0 + $0x8] sm:$0xff]
  %v23 = vld [vmem:[%s0 + $0x10] sm:$0xff]
  %v24 = vld [vmem:[%s0 + $0x18] sm:$0xff]
  %v25 = vld [vmem:[%s0 + $0x20] sm:$0xff]
  %v26 = vld [vmem:[%s0 + $0x28] sm:$0xff]
  %v27 = vld [vmem:[%s0 + $0x30] sm:$0xff]
  %v28 = vld [vmem:[%s0 + $0x38] sm:$0xff]
  %v29 = vld [vmem:[%s0 + $0x40] sm:$0xff]
  %v30 = vld [vmem:[%s0 + $0x48] sm:$0xff]
  %v31 = vld [vmem:[%s0 + $0x50] sm:$0xff]
  %v32 = vld [vmem:[%s0 + $0x58] sm:$0xff]
  %v33 = vld [vmem:[%s0 + $0x60] sm:$0xff]
  %v34 = vld [vmem:[%s0 + $0x68] sm:$0xff]
  %v35 = vld [vmem:[%s0 + $0x70] sm:$0xff]
  %v36 = vld [vmem:[%s0 + $0x78] sm:$0xff]
  %v37 = vld [vmem:[%s0 + $0x80] sm:$0xff]
  %v38 = vld [vmem:[%s0 + $0x88] sm:$0xff]
  %v39 = vld [vmem:[%s0 + $0x90] sm:$0xff]
  %v40 = vld [vmem:[%s0 + $0x98] sm:$0xff]
  %v41 = vld [vmem:[%s0 + $0xa0] sm:$0xff]
  %v42 = vld [vmem:[%s0 + $0xa8] sm:$0xff]
  %v43 = vld [vmem:[%s0 + $0xb0] sm:$0xff]
  %v44 = vld [vmem:[%s0 + $0xb8] sm:$0xff]
  %v45 = vld [vmem:[%s0 + $0xc0] sm:$0xff]
  %v46 = vld [vmem:[%s0 + $0xc8] sm:$0xff]
  %v47 = vld [vmem:[%s0 + $0xd0] sm:$0xff]
  %v48 = vld [vmem:[%s0 + $0xd8] sm:$0xff]
  %v49 = vld [vmem:[%s0 + $0xe0] sm:$0xff]
  %v50 = vld [vmem:[%s0 + $0xe8] sm:$0xff]
  %v51 = vld [vmem:[%s0 + $0xf0] sm:$0xff]
  %v52 = vld [vmem:[%s0 + $0xf8] sm:$0xff]
  %v53 = vld [vmem:[%s0 + $0x100] sm:$0xff]
  %v54 = vld [vmem:[%s0 + $0x108] sm:$0xff]
  %v55 = vld [vmem:[%s0 + $0x110] sm:$0xff]
  %v56 = vld [vmem:[%s0 + $0x118] sm:$0xff]
  %v57 = vld [vmem:[%s0 + $0x120] sm:$0xff]
  %v58 = vld [vmem:[%s0 + $0x128] sm:$0xff]
  %v59 = vld [vmem:[%s0 + $0x130] sm:$0xff]
  %v60 = vld [vmem:[%s0 + $0x138] sm:$0xff]
  %v61 = vld [vmem:[%s0 + $0x140] sm:$0xff]
  %v62 = vld [vmem:[%s0 + $0x148] sm:$0xff]
  %v63 = vld [vmem:[%s0 + $0x150] sm:$0xff]
  %v64 = vld [vmem:[%s0 + $0x158] sm:$0xff]
  %v65 = vld [vmem:[%s0 + $0x160] sm:$0xff]
  %v66 = vld [vmem:[%s0 + $0x168] sm:$0xff]
  %v67 = vld [vmem:[%s0 + $0x170] sm:$0xff]
  %v68 = vld [vmem:[%s0 + $0x178] sm:$0xff]
  %v69 = vld [vmem:[%s0 + $0x180] sm:$0xff]
  %v70 = vld [vmem:[%s0 + $0x188] sm:$0xff]
  %v71 = vld [vmem:[%s0 + $0x190] sm:$0xff]
  %v72 = vld [vmem:[%s0 + $0x198] sm:$0xff]
  %v73 = vld [vmem:[%s0 + $0x1a0] sm:$0xff]
  %v74 = vld [vmem:[%s0 + $0x1a8] sm:$0xff]
  %v75 = vld [vmem:[%s0 + $0x1b0] sm:$0xff]
  %v76 = vld [vmem:[%s0 + $0x1b8] sm:$0xff]
  %v77 = vld [vmem:[%s0 + $0x1c0] sm:$0xff]
  %v78 = vld [vmem:[%s0 + $0x1c8] sm:$0xff]
  %v79 = vld [vmem:[%s0 + $0x1d0] sm:$0xff]
  %v80 = vld [vmem:[%s0 + $0x1d8] sm:$0xff]
  %v81 = vld [vmem:[%s0 + $0x1e0] sm:$0xff]
  %v82 = vld [vmem:[%s0 + $0x1e8] sm:$0xff]
  %v83 = vld [vmem:[%s0 + $0x1f0] sm:$0xff]
  %v84 = vld [vmem:[%s0 + $0x1f8] sm:$0xff]
  %v85 = vld [vmem:[%s0 + $0x200] sm:$0xff]
  %v86 = vld [vmem:[%s0 + $0x208] sm:$0xff]
  %v87 = vld [vmem:[%s0 + $0x210] sm:$0xff]
  %v88 = vld [vmem:[%s0 + $0x218] sm:$0xff]
  %v89 = vld [vmem:[%s0 + $0x220] sm:$0xff]
  %v90 = vld [vmem:[%s0 + $0x228] sm:$0xff]
  %v91 = vld [vmem:[%s0 + $0x230] sm:$0xff]
  %v92 = vld [vmem:[%s0 + $0x238] sm:$0xff]
  %v93 = vld [vmem:[%s0 + $0x240] sm:$0xff]
  %v94 = vld [vmem:[%s0 + $0x248] sm:$0xff]
  %v95 = vld [vmem:[%s0 + $0x250] sm:$0xff]
  %v96 = vld [vmem:[%s0 + $0x258] sm:$0xff]
  %v97 = vld [vmem:[%s0 + $0x260] sm:$0xff]
  %v98 = vld [vmem:[%s0 + $0x268] sm:$0xff]
  %v99 = vld [vmem:[%s0 + $0x270] sm:$0xff]
  %v100 = vld [vmem:[%s0 + $0x278] sm:$0xff]
  %v101 = vld [vmem:[%s0 + $0x280] sm:$0xff]
  %v102 = vld [vmem:[%s0 + $0x288] sm:$0xff]
  %v103 = vld [vmem:[%s0 + $0x290] sm:$0xff]
  %v104 = vld [vmem:[%s0 + $0x298] sm:$0xff]
  %v105 = vld [vmem:[%s0 + $0x2a0] sm:$0xff]
  %v106 = vld [vmem:[%s0 + $0x2a8] sm:$0xff]
  %v107 = vld [vmem:[%s0 + $0x2b0] sm:$0xff]
  %v108 = vld [vmem:[%s0 + $0x2b8] sm:$0xff]
  %v109 = vld [vmem:[%s0 + $0x2c0] sm:$0xff]
  %v110 = vld [vmem:[%s0 + $0x2c8] sm:$0xff]
  %v111 = vld [vmem:[%s0 + $0x2d0] sm:$0xff]
  %v112 = vld [vmem:[%s0 + $0x2d8] sm:$0xff]
  %v113 = vld [vmem:[%s0 + $0x2e0] sm:$0xff]
  %v114 = vld [vmem:[%s0 + $0x2e8] sm:$0xff]
  %v115 = vld [vmem:[%s0 + $0x2f0] sm:$0xff]
  %v116 = vld [vmem:[%s0 + $0x2f8] sm:$0xff]
  %v117 = vld [vmem:[%s0 + $0x300] sm:$0xff]
  %v118 = vld [vmem:[%s0 + $0x308] sm:$0xff]
  %v119 = vld [vmem:[%s0 + $0x310] sm:$0xff]
  %v120 = vld [vmem:[%s0 + $0x318] sm:$0xff]
  %v121 = vld [vmem:[%s0 + $0x320] sm:$0xff]
  %v122 = vld [vmem:[%s0 + $0x328] sm:$0xff]
  %v123 = vld [vmem:[%s0 + $0x330] sm:$0xff]
  %v124 = vld [vmem:[%s0 + $0x338] sm:$0xff]
  %v125 = vld [vmem:[%s0 + $0x340] sm:$0xff]
  %v126 = vld [vmem:[%s0 + $0x348] sm:$0xff]
  %v127 = vld [vmem:[%s0 + $0x350] sm:$0xff]
  %v128 = vld [vmem:[%s0 + $0x358] sm:$0xff]
  %v129 = vld [vmem:[%s0 + $0x360] sm:$0xff]
  %v130 = vld [vmem:[%s0 + $0x368] sm:$0xff]
  %v131 = vld [vmem:[%s0 + $0x370] sm:$0xff]
  %v132 = vld [vmem:[%s0 + $0x378] sm:$0xff]
  %v133 = vld [vmem:[%s0 + $0x380] sm:$0xff]
  %v134 = vld [vmem:[%s0 + $0x388] sm:$0xff]
  %v135 = vld [vmem:[%s0 + $0x390] sm:$0xff]
  %v136 = vld [vmem:[%s0 + $0x398] sm:$0xff]
  %v137 = vld [vmem:[%s0 + $0x3a0] sm:$0xff]
  %v138 = vld [vmem:[%s0 + $0x3a8] sm:$0xff]
  %v139 = vld [vmem:[%s0 + $0x3b0] sm:$0xff]
  %v140 = vld [vmem:[%s0 + $0x3b8] sm:$0xff]
  %v141 = vld [vmem:[%s0 + $0x3c0] sm:$0xff]
  %v142 = vld [vmem:[%s0 + $0x3c8] sm:$0xff]
  %v143 = vld [vmem:[%s0 + $0x3d0] sm:$0xff]
  %v144 = vld [vmem:[%s0 + $0x3d8] sm:$0xff]
  %v145 = vld [vmem:[%s0 + $0x3e0] sm:$0xff]
  %v146 = vld [vmem:[%s0 + $0x3e8] sm:$0xff]
  %v147 = vld [vmem:[%s0 + $0x3f0] sm:$0xff]
  %v148 = vld [vmem:[%s0 + $0x3f8] sm:$0xff]
  %v149 = vld [vmem:[%s0 + $0x400] sm:$0xff]
  %v150 = vld [vmem:[%s0 + $0x408] sm:$0xff]
  %v151 = vld [vmem:[%s0 + $0x410] sm:$0xff]
  %v152 = vld [vmem:[%s0 + $0x418] sm:$0xff]
  %v153 = vld [vmem:[%s0 + $0x420] sm:$0xff]
  %v154 = vld [vmem:[%s0 + $0x428] sm:$0xff]
  %v155 = vld [vmem:[%s0 + $0x430] sm:$0xff]
  %v156 = vld [vmem:[%s0 + $0x438] sm:$0xff]
  %v157 = vld [vmem:[%s0 + $0x440] sm:$0xff]
  %v158 = vld [vmem:[%s0 + $0x448] sm:$0xff]
  %v159 = vld [vmem:[%s0 + $0x450] sm:$0xff]
  %v160 = vld [vmem:[%s0 + $0x458] sm:$0xff]
  %v161 = vld [vmem:[%s0 + $0x460] sm:$0xff]
  %v162 = vld [vmem:[%s0 + $0x468] sm:$0xff]
  %v163 = vld [vmem:[%s0 + $0x470] sm:$0xff]
  %v164 = vld [vmem:[%s0 + $0x478] sm:$0xff]
  %v165 = vld [vmem:[%s0 + $0x480] sm:$0xff]
  %v166 = vld [vmem:[%s0 + $0x488] sm:$0xff]
  %v167 = vld [vmem:[%s0 + $0x490] sm:$0xff]
  %v168 = vld [vmem:[%s0 + $0x498] sm:$0xff]
  %v169 = vld [vmem:[%s0 + $0x4a0] sm:$0xff]
  %v170 = vld [vmem:[%s0 + $0x4a8] sm:$0xff]
  %v171 = vld [vmem:[%s0 + $0x4b0] sm:$0xff]
  %v172 = vld [vmem:[%s0 + $0x4b8] sm:$0xff]
  %v173 = vld [vmem:[%s0 + $0x4c0] sm:$0xff]
  %v174 = vld [vmem:[%s0 + $0x4c8] sm:$0xff]
  %v175 = vld [vmem:[%s0 + $0x4d0] sm:$0xff]
  %v176 = vld [vmem:[%s0 + $0x4d8] sm:$0xff]
  %v177 = vld [vmem:[%s0 + $0x4e0] sm:$0xff]
  %v178 = vld [vmem:[%s0 + $0x4e8] sm:$0xff]
  %v179 = vld [vmem:[%s0 + $0x4f0] sm:$0xff]
  %v180 = vld [vmem:[%s0 + $0x4f8] sm:$0xff]
  %v181 = vld [vmem:[%s0 + $0x500] sm:$0xff]
  %v182 = vld [vmem:[%s0 + $0x508] sm:$0xff]
  %v183 = vld [vmem:[%s0 + $0x510] sm:$0xff]
  %v184 = vld [vmem:[%s0 + $0x518] sm:$0xff]
  %v185 = vld [vmem:[%s0 + $0x520] sm:$0xff]
  %v186 = vld [vmem:[%s0 + $0x528] sm:$0xff]
  %v187 = vld [vmem:[%s0 + $0x530] sm:$0xff]
  %v188 = vld [vmem:[%s0 + $0x538] sm:$0xff]
  %v189 = vld [vmem:[%s0 + $0x540] sm:$0xff]
  %v190 = vld [vmem:[%s0 + $0x548] sm:$0xff]
  %v191 = vld [vmem:[%s0 + $0x550] sm:$0xff]
  %v192 = vld [vmem:[%s0 + $0x558] sm:$0xff]
  %v193 = vld [vmem:[%s0 + $0x560] sm:$0xff]
  %v194 = vld [vmem:[%s0 + $0x568] sm:$0xff]
  %v195 = vld [vmem:[%s0 + $0x570] sm:$0xff]
  %v196 = vld [vmem:[%s0 + $0x578] sm:$0xff]
  %v197 = vld [vmem:[%s0 + $0x580] sm:$0xff]
  %v198 = vld [vmem:[%s0 + $0x588] sm:$0xff]
  %v199 = vld [vmem:[%s0 + $0x590] sm:$0xff]
  %v200 = vld [vmem:[%s0 + $0x598] sm:$0xff]
  %v201 = vld [vmem:[%s0 + $0x5a0] sm:$0xff]
  %v202 = vld [vmem:[%s0 + $0x5a8] sm:$0xff]
  %v203 = vld [vmem:[%s0 + $0x5b0] sm:$0xff]
  %v204 = vld [vmem:[%s0 + $0x5b8] sm:$0xff]
  %v205 = vld [vmem:[%s0 + $0x5c0] sm:$0xff]
  %v206 = vld [vmem:[%s0 + $0x5c8] sm:$0xff]
  %v207 = vld [vmem:[%s0 + $0x5d0] sm:$0xff]
  %v208 = vld [vmem:[%s0 + $0x5d8] sm:$0xff]
  %v209 = vld [vmem:[%s0 + $0x5e0] sm:$0xff]
  %v210 = vld [vmem:[%s0 + $0x5e8] sm:$0xff]
  %v211 = vld [vmem:[%s0 + $0x5f0] sm:$0xff]
  %v212 = vld [vmem:[%s0 + $0x5f8] sm:$0xff]
  %v213 = vld [vmem:[%s0 + $0x600] sm:$0xff]
  %v214 = vld [vmem:[%s0 + $0x608] sm:$0xff]
  %v215 = vld [vmem:[%s0 + $0x610] sm:$0xff]
  %v216 = vld [vmem:[%s0 + $0x618] sm:$0xff]
  %v217 = vld [vmem:[%s0 + $0x620] sm:$0xff]
  %v218 = vld [vmem:[%s0 + $0x628] sm:$0xff]
  %v219 = vld [vmem:[%s0 + $0x630] sm:$0xff]
  %v220 = vld [vmem:[%s0 + $0x638] sm:$0xff]
  %v221 = vpack.c.bf16 %v22, %v21
  %v222 = vpack.c.bf16 %v24, %v23
  %v223 = vpack.c.bf16 %v26, %v25
  %v224 = vpack.c.bf16 %v28, %v27
  %v225 = vpack.c.bf16 %v30, %v29
  %v226 = vpack.c.bf16 %v32, %v31
  %v227 = vpack.c.bf16 %v34, %v33
  %v228 = vpack.c.bf16 %v36, %v35
  %v229 = vpack.c.bf16 %v38, %v37
  %v230 = vpack.c.bf16 %v40, %v39
  %v231 = vpack.c.bf16 %v42, %v41
  %v232 = vpack.c.bf16 %v44, %v43
  %v233 = vpack.c.bf16 %v46, %v45
  %v234 = vpack.c.bf16 %v48, %v47
  %v235 = vpack.c.bf16 %v50, %v49
  %v236 = vpack.c.bf16 %v52, %v51
  %v237 = vpack.c.bf16 %v54, %v53
  %v238 = vpack.c.bf16 %v56, %v55
  %v239 = vpack.c.bf16 %v58, %v57
  %v240 = vpack.c.bf16 %v60, %v59
  %v241 = vpack.c.bf16 %v62, %v61
  %v242 = vpack.c.bf16 %v64, %v63
  %v243 = vpack.c.bf16 %v66, %v65
  %v244 = vpack.c.bf16 %v68, %v67
  %v245 = vpack.c.bf16 %v70, %v69
  %v246 = vpack.c.bf16 %v72, %v71
  %v247 = vpack.c.bf16 %v74, %v73
  %v248 = vpack.c.bf16 %v76, %v75
  %v249 = vpack.c.bf16 %v78, %v77
  %v250 = vpack.c.bf16 %v80, %v79
  %v251 = vpack.c.bf16 %v82, %v81
  %v252 = vpack.c.bf16 %v84, %v83
  %v253 = vpack.c.bf16 %v86, %v85
  %v254 = vpack.c.bf16 %v88, %v87
  %v255 = vpack.c.bf16 %v90, %v89
  %v256 = vpack.c.bf16 %v92, %v91
  %v257 = vpack.c.bf16 %v94, %v93
  %v258 = vpack.c.bf16 %v96, %v95
  %v259 = vpack.c.bf16 %v98, %v97
  %v260 = vpack.c.bf16 %v100, %v99
  %v261 = vpack.c.bf16 %v102, %v101
  %v262 = vpack.c.bf16 %v104, %v103
  %v263 = vpack.c.bf16 %v106, %v105
  %v264 = vpack.c.bf16 %v108, %v107
  %v265 = vpack.c.bf16 %v110, %v109
  %v266 = vpack.c.bf16 %v112, %v111
  %v267 = vpack.c.bf16 %v114, %v113
  %v268 = vpack.c.bf16 %v116, %v115
  %v269 = vpack.c.bf16 %v118, %v117
  %v270 = vpack.c.bf16 %v120, %v119
  %v271 = vpack.c.bf16 %v122, %v121
  %v272 = vpack.c.bf16 %v124, %v123
  %v273 = vpack.c.bf16 %v126, %v125
  %v274 = vpack.c.bf16 %v128, %v127
  %v275 = vpack.c.bf16 %v130, %v129
  %v276 = vpack.c.bf16 %v132, %v131
  %v277 = vpack.c.bf16 %v134, %v133
  %v278 = vpack.c.bf16 %v136, %v135
  %v279 = vpack.c.bf16 %v138, %v137
  %v280 = vpack.c.bf16 %v140, %v139
  %v281 = vpack.c.bf16 %v142, %v141
  %v282 = vpack.c.bf16 %v144, %v143
  %v283 = vpack.c.bf16 %v146, %v145
  %v284 = vpack.c.bf16 %v148, %v147
  %v285 = vpack.c.bf16 %v150, %v149
  %v286 = vpack.c.bf16 %v152, %v151
  %v287 = vpack.c.bf16 %v154, %v153
  %v288 = vpack.c.bf16 %v156, %v155
  %v289 = vpack.c.bf16 %v158, %v157
  %v290 = vpack.c.bf16 %v160, %v159
  %v291 = vpack.c.bf16 %v162, %v161
  %v292 = vpack.c.bf16 %v164, %v163
  %v293 = vpack.c.bf16 %v166, %v165
  %v294 = vpack.c.bf16 %v168, %v167
  %v295 = vpack.c.bf16 %v170, %v169
  %v296 = vpack.c.bf16 %v172, %v171
  %v297 = vpack.c.bf16 %v174, %v173
  %v298 = vpack.c.bf16 %v176, %v175
  %v299 = vpack.c.bf16 %v178, %v177
  %v300 = vpack.c.bf16 %v180, %v179
  %v301 = vpack.c.bf16 %v182, %v181
  %v302 = vpack.c.bf16 %v184, %v183
  %v303 = vpack.c.bf16 %v186, %v185
  %v304 = vpack.c.bf16 %v188, %v187
  %v305 = vpack.c.bf16 %v190, %v189
  %v306 = vpack.c.bf16 %v192, %v191
  %v307 = vpack.c.bf16 %v194, %v193
  %v308 = vpack.c.bf16 %v196, %v195
  %v309 = vpack.c.bf16 %v198, %v197
  %v310 = vpack.c.bf16 %v200, %v199
  %v311 = vpack.c.bf16 %v202, %v201
  %v312 = vpack.c.bf16 %v204, %v203
  %v313 = vpack.c.bf16 %v206, %v205
  %v314 = vpack.c.bf16 %v208, %v207
  %v315 = vpack.c.bf16 %v210, %v209
  %v316 = vpack.c.bf16 %v212, %v211
  %v317 = vpack.c.bf16 %v214, %v213
  %v318 = vpack.c.bf16 %v216, %v215
  %v319 = vpack.c.bf16 %v218, %v217
  %v320 = vpack.c.bf16 %v220, %v219
  %v321 = vld [vmem:[%s1] sm:$0xff]
  %v322 = vld [vmem:[%s1 + $0x8] sm:$0xff]
  %v323 = vld [vmem:[%s1 + $0x10] sm:$0xff]
  %v324 = vld [vmem:[%s1 + $0x18] sm:$0xff]
  %v325 = vld [vmem:[%s1 + $0x20] sm:$0xff]
  %v326 = vld [vmem:[%s1 + $0x28] sm:$0xff]
  %v327 = vld [vmem:[%s1 + $0x30] sm:$0xf]
  %v328 = vld [vmem:[%s1 + $0x34] sm:$0xff]
  %v329 = vld [vmem:[%s1 + $0x3c] sm:$0xff]
  %v330 = vld [vmem:[%s1 + $0x44] sm:$0xff]
  %v331 = vld [vmem:[%s1 + $0x4c] sm:$0xff]
  %v332 = vld [vmem:[%s1 + $0x54] sm:$0xff]
  %v333 = vld [vmem:[%s1 + $0x5c] sm:$0xff]
  %v334 = vld [vmem:[%s1 + $0x64] sm:$0xf]
  %v335 = vld [vmem:[%s1 + $0x68] sm:$0xff]
  %v336 = vld [vmem:[%s1 + $0x70] sm:$0xff]
  %v337 = vld [vmem:[%s1 + $0x78] sm:$0xff]
  %v338 = vld [vmem:[%s1 + $0x80] sm:$0xff]
  %v339 = vld [vmem:[%s1 + $0x88] sm:$0xff]
  %v340 = vld [vmem:[%s1 + $0x90] sm:$0xff]
  %v341 = vld [vmem:[%s1 + $0x98] sm:$0xf]
  %v342 = vld [vmem:[%s1 + $0x9c] sm:$0xff]
  %v343 = vld [vmem:[%s1 + $0xa4] sm:$0xff]
  %v344 = vld [vmem:[%s1 + $0xac] sm:$0xff]
  %v345 = vld [vmem:[%s1 + $0xb4] sm:$0xff]
  %v346 = vld [vmem:[%s1 + $0xbc] sm:$0xff]
  %v347 = vld [vmem:[%s1 + $0xc4] sm:$0xff]
  %v348 = vld [vmem:[%s1 + $0xcc] sm:$0xf]
  %v349 = vld [vmem:[%s1 + $0xd0] sm:$0xff]
  %v350 = vld [vmem:[%s1 + $0xd8] sm:$0xff]
  %v351 = vld [vmem:[%s1 + $0xe0] sm:$0xff]
  %v352 = vld [vmem:[%s1 + $0xe8] sm:$0xff]
  %v353 = vld [vmem:[%s1 + $0xf0] sm:$0xff]
  %v354 = vld [vmem:[%s1 + $0xf8] sm:$0xff]
  %v355 = vld [vmem:[%s1 + $0x100] sm:$0xf]
  %v356 = vld [vmem:[%s1 + $0x104] sm:$0xff]
  %v357 = vld [vmem:[%s1 + $0x10c] sm:$0xff]
  %v358 = vld [vmem:[%s1 + $0x114] sm:$0xff]
  %v359 = vld [vmem:[%s1 + $0x11c] sm:$0xff]
  %v360 = vld [vmem:[%s1 + $0x124] sm:$0xff]
  %v361 = vld [vmem:[%s1 + $0x12c] sm:$0xff]
  %v362 = vld [vmem:[%s1 + $0x134] sm:$0xf]
  %v363 = vld [vmem:[%s1 + $0x138] sm:$0xff]
  %v364 = vld [vmem:[%s1 + $0x140] sm:$0xff]
  %v365 = vld [vmem:[%s1 + $0x148] sm:$0xff]
  %v366 = vld [vmem:[%s1 + $0x150] sm:$0xff]
  %v367 = vld [vmem:[%s1 + $0x158] sm:$0xff]
  %v368 = vld [vmem:[%s1 + $0x160] sm:$0xff]
  %v369 = vld [vmem:[%s1 + $0x168] sm:$0xf]
  %v370 = vld [vmem:[%s1 + $0x16c] sm:$0xff]
  %v371 = vld [vmem:[%s1 + $0x174] sm:$0xff]
  %v372 = vld [vmem:[%s1 + $0x17c] sm:$0xff]
  %v373 = vld [vmem:[%s1 + $0x184] sm:$0xff]
  %v374 = vld [vmem:[%s1 + $0x18c] sm:$0xff]
  %v375 = vld [vmem:[%s1 + $0x194] sm:$0xff]
  %v376 = vld [vmem:[%s1 + $0x19c] sm:$0xf]
  %v377 = vld [vmem:[%s1 + $0x1a0] sm:$0xff]
  %v378 = vld [vmem:[%s1 + $0x1a8] sm:$0xff]
  %v379 = vld [vmem:[%s1 + $0x1b0] sm:$0xff]
  %v380 = vld [vmem:[%s1 + $0x1b8] sm:$0xff]
  %v381 = vld [vmem:[%s1 + $0x1c0] sm:$0xff]
  %v382 = vld [vmem:[%s1 + $0x1c8] sm:$0xff]
  %v383 = vld [vmem:[%s1 + $0x1d0] sm:$0xf]
  %v384 = vld [vmem:[%s1 + $0x1d4] sm:$0xff]
  %v385 = vld [vmem:[%s1 + $0x1dc] sm:$0xff]
  %v386 = vld [vmem:[%s1 + $0x1e4] sm:$0xff]
  %v387 = vld [vmem:[%s1 + $0x1ec] sm:$0xff]
  %v388 = vld [vmem:[%s1 + $0x1f4] sm:$0xff]
  %v389 = vld [vmem:[%s1 + $0x1fc] sm:$0xff]
  %v390 = vld [vmem:[%s1 + $0x204] sm:$0xf]
  %v391 = vld [vmem:[%s1 + $0x208] sm:$0xff]
  %v392 = vld [vmem:[%s1 + $0x210] sm:$0xff]
  %v393 = vld [vmem:[%s1 + $0x218] sm:$0xff]
  %v394 = vld [vmem:[%s1 + $0x220] sm:$0xff]
  %v395 = vld [vmem:[%s1 + $0x228] sm:$0xff]
  %v396 = vld [vmem:[%s1 + $0x230] sm:$0xff]
  %v397 = vld [vmem:[%s1 + $0x238] sm:$0xf]
  %v398 = vld [vmem:[%s1 + $0x23c] sm:$0xff]
  %v399 = vld [vmem:[%s1 + $0x244] sm:$0xff]
  %v400 = vld [vmem:[%s1 + $0x24c] sm:$0xff]
  %v401 = vld [vmem:[%s1 + $0x254] sm:$0xff]
  %v402 = vld [vmem:[%s1 + $0x25c] sm:$0xff]
  %v403 = vld [vmem:[%s1 + $0x264] sm:$0xff]
  %v404 = vld [vmem:[%s1 + $0x26c] sm:$0xf]
  %v405 = vld [vmem:[%s1 + $0x270] sm:$0xff]
  %v406 = vld [vmem:[%s1 + $0x278] sm:$0xff]
  %v407 = vld [vmem:[%s1 + $0x280] sm:$0xff]
  %v408 = vld [vmem:[%s1 + $0x288] sm:$0xff]
  %v409 = vld [vmem:[%s1 + $0x290] sm:$0xff]
  %v410 = vld [vmem:[%s1 + $0x298] sm:$0xff]
  %v411 = vld [vmem:[%s1 + $0x2a0] sm:$0xf]
  %v412 = vld [vmem:[%s1 + $0x2a4] sm:$0xff]
  %v413 = vld [vmem:[%s1 + $0x2ac] sm:$0xff]
  %v414 = vld [vmem:[%s1 + $0x2b4] sm:$0xff]
  %v415 = vld [vmem:[%s1 + $0x2bc] sm:$0xff]
  %v416 = vld [vmem:[%s1 + $0x2c4] sm:$0xff]
  %v417 = vld [vmem:[%s1 + $0x2cc] sm:$0xff]
  %v418 = vld [vmem:[%s1 + $0x2d4] sm:$0xf]
  %v419 = vld [vmem:[%s1 + $0x2d8] sm:$0xff]
  %v420 = vld [vmem:[%s1 + $0x2e0] sm:$0xff]
  %v421 = vld [vmem:[%s1 + $0x2e8] sm:$0xff]
  %v422 = vld [vmem:[%s1 + $0x2f0] sm:$0xff]
  %v423 = vld [vmem:[%s1 + $0x2f8] sm:$0xff]
  %v424 = vld [vmem:[%s1 + $0x300] sm:$0xff]
  %v425 = vld [vmem:[%s1 + $0x308] sm:$0xf]
  %v426 = vld [vmem:[%s1 + $0x30c] sm:$0xff]
  %v427 = vld [vmem:[%s1 + $0x314] sm:$0xff]
  %v428 = vld [vmem:[%s1 + $0x31c] sm:$0xff]
  %v429 = vld [vmem:[%s1 + $0x324] sm:$0xff]
  %v430 = vld [vmem:[%s1 + $0x32c] sm:$0xff]
  %v431 = vld [vmem:[%s1 + $0x334] sm:$0xff]
  %v432 = vld [vmem:[%s1 + $0x33c] sm:$0xf]
  %v545 = vunpack.c.l.b16 %v321
  %v546 = vunpack.c.h.b16 %v321
  %v547 = vunpack.c.l.b16 %v322
  %v548 = vunpack.c.h.b16 %v322
  %v549 = vunpack.c.l.b16 %v323
  %v550 = vunpack.c.h.b16 %v323
  %v551 = vunpack.c.l.b16 %v324
  %v552 = vunpack.c.h.b16 %v324
  %v553 = vunpack.c.l.b16 %v325
  %v554 = vunpack.c.h.b16 %v325
  %v555 = vunpack.c.l.b16 %v326
  %v556 = vunpack.c.h.b16 %v326
  %v557 = vunpack.c.l.b16 %v327
  %v558 = vunpack.c.l.b16 %v328
  %v559 = vunpack.c.h.b16 %v328
  %v560 = vunpack.c.l.b16 %v329
  %v561 = vunpack.c.h.b16 %v329
  %v562 = vunpack.c.l.b16 %v330
  %v563 = vunpack.c.h.b16 %v330
  %v564 = vunpack.c.l.b16 %v331
  %v565 = vunpack.c.h.b16 %v331
  %v566 = vunpack.c.l.b16 %v332
  %v567 = vunpack.c.h.b16 %v332
  %v568 = vunpack.c.l.b16 %v333
  %v569 = vunpack.c.h.b16 %v333
  %v570 = vunpack.c.l.b16 %v334
  %v571 = vunpack.c.l.b16 %v335
  %v572 = vunpack.c.h.b16 %v335
  %v573 = vunpack.c.l.b16 %v336
  %v574 = vunpack.c.h.b16 %v336
  %v575 = vunpack.c.l.b16 %v337
  %v576 = vunpack.c.h.b16 %v337
  %v577 = vunpack.c.l.b16 %v338
  %v578 = vunpack.c.h.b16 %v338
  %v579 = vunpack.c.l.b16 %v339
  %v580 = vunpack.c.h.b16 %v339
  %v581 = vunpack.c.l.b16 %v340
  %v582 = vunpack.c.h.b16 %v340
  %v583 = vunpack.c.l.b16 %v341
  %v584 = vunpack.c.l.b16 %v342
  %v585 = vunpack.c.h.b16 %v342
  %v586 = vunpack.c.l.b16 %v343
  %v587 = vunpack.c.h.b16 %v343
  %v588 = vunpack.c.l.b16 %v344
  %v589 = vunpack.c.h.b16 %v344
  %v590 = vunpack.c.l.b16 %v345
  %v591 = vunpack.c.h.b16 %v345
  %v592 = vunpack.c.l.b16 %v346
  %v593 = vunpack.c.h.b16 %v346
  %v594 = vunpack.c.l.b16 %v347
  %v595 = vunpack.c.h.b16 %v347
  %v596 = vunpack.c.l.b16 %v348
  %v597 = vunpack.c.l.b16 %v349
  %v598 = vunpack.c.h.b16 %v349
  %v599 = vunpack.c.l.b16 %v350
  %v600 = vunpack.c.h.b16 %v350
  %v601 = vunpack.c.l.b16 %v351
  %v602 = vunpack.c.h.b16 %v351
  %v603 = vunpack.c.l.b16 %v352
  %v604 = vunpack.c.h.b16 %v352
  %v605 = vunpack.c.l.b16 %v353
  %v606 = vunpack.c.h.b16 %v353
  %v607 = vunpack.c.l.b16 %v354
  %v608 = vunpack.c.h.b16 %v354
  %v609 = vunpack.c.l.b16 %v355
  %v610 = vunpack.c.l.b16 %v356
  %v611 = vunpack.c.h.b16 %v356
  %v612 = vunpack.c.l.b16 %v357
  %v613 = vunpack.c.h.b16 %v357
  %v614 = vunpack.c.l.b16 %v358
  %v615 = vunpack.c.h.b16 %v358
  %v616 = vunpack.c.l.b16 %v359
  %v617 = vunpack.c.h.b16 %v359
  %v618 = vunpack.c.l.b16 %v360
  %v619 = vunpack.c.h.b16 %v360
  %v620 = vunpack.c.l.b16 %v361
  %v621 = vunpack.c.h.b16 %v361
  %v622 = vunpack.c.l.b16 %v362
  %v623 = vunpack.c.l.b16 %v363
  %v624 = vunpack.c.h.b16 %v363
  %v625 = vunpack.c.l.b16 %v364
  %v626 = vunpack.c.h.b16 %v364
  %v627 = vunpack.c.l.b16 %v365
  %v628 = vunpack.c.h.b16 %v365
  %v629 = vunpack.c.l.b16 %v366
  %v630 = vunpack.c.h.b16 %v366
  %v631 = vunpack.c.l.b16 %v367
  %v632 = vunpack.c.h.b16 %v367
  %v633 = vunpack.c.l.b16 %v368
  %v634 = vunpack.c.h.b16 %v368
  %v635 = vunpack.c.l.b16 %v369
  %v636 = vunpack.c.l.b16 %v370
  %v637 = vunpack.c.h.b16 %v370
  %v638 = vunpack.c.l.b16 %v371
  %v639 = vunpack.c.h.b16 %v371
  %v640 = vunpack.c.l.b16 %v372
  %v641 = vunpack.c.h.b16 %v372
  %v642 = vunpack.c.l.b16 %v373
  %v643 = vunpack.c.h.b16 %v373
  %v644 = vunpack.c.l.b16 %v374
  %v645 = vunpack.c.h.b16 %v374
  %v646 = vunpack.c.l.b16 %v375
  %v647 = vunpack.c.h.b16 %v375
  %v648 = vunpack.c.l.b16 %v376
  %v649 = vunpack.c.l.b16 %v377
  %v650 = vunpack.c.h.b16 %v377
  %v651 = vunpack.c.l.b16 %v378
  %v652 = vunpack.c.h.b16 %v378
  %v653 = vunpack.c.l.b16 %v379
  %v654 = vunpack.c.h.b16 %v379
  %v655 = vunpack.c.l.b16 %v380
  %v656 = vunpack.c.h.b16 %v380
  %v657 = vunpack.c.l.b16 %v381
  %v658 = vunpack.c.h.b16 %v381
  %v659 = vunpack.c.l.b16 %v382
  %v660 = vunpack.c.h.b16 %v382
  %v661 = vunpack.c.l.b16 %v383
  %v662 = vunpack.c.l.b16 %v384
  %v663 = vunpack.c.h.b16 %v384
  %v664 = vunpack.c.l.b16 %v385
  %v665 = vunpack.c.h.b16 %v385
  %v666 = vunpack.c.l.b16 %v386
  %v667 = vunpack.c.h.b16 %v386
  %v668 = vunpack.c.l.b16 %v387
  %v669 = vunpack.c.h.b16 %v387
  %v670 = vunpack.c.l.b16 %v388
  %v671 = vunpack.c.h.b16 %v388
  %v672 = vunpack.c.l.b16 %v389
  %v673 = vunpack.c.h.b16 %v389
  %v674 = vunpack.c.l.b16 %v390
  %v675 = vunpack.c.l.b16 %v391
  %v676 = vunpack.c.h.b16 %v391
  %v677 = vunpack.c.l.b16 %v392
  %v678 = vunpack.c.h.b16 %v392
  %v679 = vunpack.c.l.b16 %v393
  %v680 = vunpack.c.h.b16 %v393
  %v681 = vunpack.c.l.b16 %v394
  %v682 = vunpack.c.h.b16 %v394
  %v683 = vunpack.c.l.b16 %v395
  %v684 = vunpack.c.h.b16 %v395
  %v685 = vunpack.c.l.b16 %v396
  %v686 = vunpack.c.h.b16 %v396
  %v687 = vunpack.c.l.b16 %v397
  %v688 = vunpack.c.l.b16 %v398
  %v689 = vunpack.c.h.b16 %v398
  %v690 = vunpack.c.l.b16 %v399
  %v691 = vunpack.c.h.b16 %v399
  %v692 = vunpack.c.l.b16 %v400
  %v693 = vunpack.c.h.b16 %v400
  %v694 = vunpack.c.l.b16 %v401
  %v695 = vunpack.c.h.b16 %v401
  %v696 = vunpack.c.l.b16 %v402
  %v697 = vunpack.c.h.b16 %v402
  %v698 = vunpack.c.l.b16 %v403
  %v699 = vunpack.c.h.b16 %v403
  %v700 = vunpack.c.l.b16 %v404
  %v701 = vunpack.c.l.b16 %v405
  %v702 = vunpack.c.h.b16 %v405
  %v703 = vunpack.c.l.b16 %v406
  %v704 = vunpack.c.h.b16 %v406
  %v705 = vunpack.c.l.b16 %v407
  %v706 = vunpack.c.h.b16 %v407
  %v707 = vunpack.c.l.b16 %v408
  %v708 = vunpack.c.h.b16 %v408
  %v709 = vunpack.c.l.b16 %v409
  %v710 = vunpack.c.h.b16 %v409
  %v711 = vunpack.c.l.b16 %v410
  %v712 = vunpack.c.h.b16 %v410
  %v713 = vunpack.c.l.b16 %v411
  %v714 = vunpack.c.l.b16 %v412
  %v715 = vunpack.c.h.b16 %v412
  %v716 = vunpack.c.l.b16 %v413
  %v717 = vunpack.c.h.b16 %v413
  %v718 = vunpack.c.l.b16 %v414
  %v719 = vunpack.c.h.b16 %v414
  %v720 = vunpack.c.l.b16 %v415
  %v721 = vunpack.c.h.b16 %v415
  %v722 = vunpack.c.l.b16 %v416
  %v723 = vunpack.c.h.b16 %v416
  %v724 = vunpack.c.l.b16 %v417
  %v725 = vunpack.c.h.b16 %v417
  %v726 = vunpack.c.l.b16 %v418
  %v727 = vunpack.c.l.b16 %v419
  %v728 = vunpack.c.h.b16 %v419
  %v729 = vunpack.c.l.b16 %v420
  %v730 = vunpack.c.h.b16 %v420
  %v731 = vunpack.c.l.b16 %v421
  %v732 = vunpack.c.h.b16 %v421
  %v733 = vunpack.c.l.b16 %v422
  %v734 = vunpack.c.h.b16 %v422
  %v735 = vunpack.c.l.b16 %v423
  %v736 = vunpack.c.h.b16 %v423
  %v737 = vunpack.c.l.b16 %v424
  %v738 = vunpack.c.h.b16 %v424
  %v739 = vunpack.c.l.b16 %v425
  %v740 = vunpack.c.l.b16 %v426
  %v741 = vunpack.c.h.b16 %v426
  %v742 = vunpack.c.l.b16 %v427
  %v743 = vunpack.c.h.b16 %v427
  %v744 = vunpack.c.l.b16 %v428
  %v745 = vunpack.c.h.b16 %v428
  %v746 = vunpack.c.l.b16 %v429
  %v747 = vunpack.c.h.b16 %v429
  %v748 = vunpack.c.l.b16 %v430
  %v749 = vunpack.c.h.b16 %v430
  %v750 = vunpack.c.l.b16 %v431
  %v751 = vunpack.c.h.b16 %v431
  %v752 = vunpack.c.l.b16 %v432
  %v753 = vpack.c.b16 %v558, %v545
  %v754 = vpack.c.b16 %v559, %v546
  %v755 = vpack.c.b16 %v560, %v547
  %v756 = vpack.c.b16 %v561, %v548
  %v757 = vpack.c.b16 %v562, %v549
  %v758 = vpack.c.b16 %v563, %v550
  %v759 = vpack.c.b16 %v564, %v551
  %v760 = vpack.c.b16 %v565, %v552
  %v761 = vpack.c.b16 %v566, %v553
  %v762 = vpack.c.b16 %v567, %v554
  %v763 = vpack.c.b16 %v568, %v555
  %v764 = vpack.c.b16 %v569, %v556
  %v765 = vpack.c.b16 %v570, %v557
  %v766 = vpack.c.b16 %v584, %v571
  %v767 = vpack.c.b16 %v585, %v572
  %v768 = vpack.c.b16 %v586, %v573
  %v769 = vpack.c.b16 %v587, %v574
  %v770 = vpack.c.b16 %v588, %v575
  %v771 = vpack.c.b16 %v589, %v576
  %v772 = vpack.c.b16 %v590, %v577
  %v773 = vpack.c.b16 %v591, %v578
  %v774 = vpack.c.b16 %v592, %v579
  %v775 = vpack.c.b16 %v593, %v580
  %v776 = vpack.c.b16 %v594, %v581
  %v777 = vpack.c.b16 %v595, %v582
  %v778 = vpack.c.b16 %v596, %v583
  %v779 = vpack.c.b16 %v610, %v597
  %v780 = vpack.c.b16 %v611, %v598
  %v781 = vpack.c.b16 %v612, %v599
  %v782 = vpack.c.b16 %v613, %v600
  %v783 = vpack.c.b16 %v614, %v601
  %v784 = vpack.c.b16 %v615, %v602
  %v785 = vpack.c.b16 %v616, %v603
  %v786 = vpack.c.b16 %v617, %v604
  %v787 = vpack.c.b16 %v618, %v605
  %v788 = vpack.c.b16 %v619, %v606
  %v789 = vpack.c.b16 %v620, %v607
  %v790 = vpack.c.b16 %v621, %v608
  %v791 = vpack.c.b16 %v622, %v609
  %v792 = vpack.c.b16 %v636, %v623
  %v793 = vpack.c.b16 %v637, %v624
  %v794 = vpack.c.b16 %v638, %v625
  %v795 = vpack.c.b16 %v639, %v626
  %v796 = vpack.c.b16 %v640, %v627
  %v797 = vpack.c.b16 %v641, %v628
  %v798 = vpack.c.b16 %v642, %v629
  %v799 = vpack.c.b16 %v643, %v630
  %v800 = vpack.c.b16 %v644, %v631
  %v801 = vpack.c.b16 %v645, %v632
  %v802 = vpack.c.b16 %v646, %v633
  %v803 = vpack.c.b16 %v647, %v634
  %v804 = vpack.c.b16 %v648, %v635
  %v805 = vpack.c.b16 %v662, %v649
  %v806 = vpack.c.b16 %v663, %v650
  %v807 = vpack.c.b16 %v664, %v651
  %v808 = vpack.c.b16 %v665, %v652
  %v809 = vpack.c.b16 %v666, %v653
  %v810 = vpack.c.b16 %v667, %v654
  %v811 = vpack.c.b16 %v668, %v655
  %v812 = vpack.c.b16 %v669, %v656
  %v813 = vpack.c.b16 %v670, %v657
  %v814 = vpack.c.b16 %v671, %v658
  %v815 = vpack.c.b16 %v672, %v659
  %v816 = vpack.c.b16 %v673, %v660
  %v817 = vpack.c.b16 %v674, %v661
  %v818 = vpack.c.b16 %v688, %v675
  %v819 = vpack.c.b16 %v689, %v676
  %v820 = vpack.c.b16 %v690, %v677
  %v821 = vpack.c.b16 %v691, %v678
  %v822 = vpack.c.b16 %v692, %v679
  %v823 = vpack.c.b16 %v693, %v680
  %v824 = vpack.c.b16 %v694, %v681
  %v825 = vpack.c.b16 %v695, %v682
  %v826 = vpack.c.b16 %v696, %v683
  %v827 = vpack.c.b16 %v697, %v684
  %v828 = vpack.c.b16 %v698, %v685
  %v829 = vpack.c.b16 %v699, %v686
  %v830 = vpack.c.b16 %v700, %v687
  %v831 = vpack.c.b16 %v714, %v701
  %v832 = vpack.c.b16 %v715, %v702
  %v833 = vpack.c.b16 %v716, %v703
  %v834 = vpack.c.b16 %v717, %v704
  %v835 = vpack.c.b16 %v718, %v705
  %v836 = vpack.c.b16 %v719, %v706
  %v837 = vpack.c.b16 %v720, %v707
  %v838 = vpack.c.b16 %v721, %v708
  %v839 = vpack.c.b16 %v722, %v709
  %v840 = vpack.c.b16 %v723, %v710
  %v841 = vpack.c.b16 %v724, %v711
  %v842 = vpack.c.b16 %v725, %v712
  %v843 = vpack.c.b16 %v726, %v713
  %v844 = vpack.c.b16 %v740, %v727
  %v845 = vpack.c.b16 %v741, %v728
  %v846 = vpack.c.b16 %v742, %v729
  %v847 = vpack.c.b16 %v743, %v730
  %v848 = vpack.c.b16 %v744, %v731
  %v849 = vpack.c.b16 %v745, %v732
  %v850 = vpack.c.b16 %v746, %v733
  %v851 = vpack.c.b16 %v747, %v734
  %v852 = vpack.c.b16 %v748, %v735
  %v853 = vpack.c.b16 %v749, %v736
  %v854 = vpack.c.b16 %v750, %v737
  %v855 = vpack.c.b16 %v751, %v738
  %v856 = vpack.c.b16 %v752, %v739
  %vm953 = vcmask 523264
  %v955 = vsel %vm953, %v765, 0
  %v958 = vsel %vm953, %v778, 0
  %v961 = vsel %vm953, %v791, 0
  %v964 = vsel %vm953, %v804, 0
  %v967 = vsel %vm953, %v817, 0
  %v970 = vsel %vm953, %v830, 0
  %v973 = vsel %vm953, %v843, 0
  %v976 = vsel %vm953, %v856, 0
  %978 = vmatprep.subr.bf16.mxu0 0
  %979 = vmatpush1.bf16.msra.mxu0 %v221
  %980 = vmatprep.subr.bf16.mxu0 0
  %981 = vmatpush1.bf16.msra.mxu0 %v222
  %982 = vmatprep.subr.bf16.mxu0 0
  %983 = vmatpush1.bf16.msra.mxu0 %v223
  %984 = vmatprep.subr.bf16.mxu0 0
  %985 = vmatpush1.bf16.msra.mxu0 %v224
  %986 = vmatprep.subr.bf16.mxu0 0
  %987 = vmatpush1.bf16.msra.mxu0 %v225
  %988 = vmatprep.subr.bf16.mxu0 0
  %989 = vmatpush1.bf16.msra.mxu0 %v226
  %990 = vmatprep.subr.bf16.mxu0 0
  %991 = vmatpush1.bf16.msra.mxu0 %v227
  %992 = vmatprep.subr.bf16.mxu0 0
  %993 = vmatpush1.bf16.msra.mxu0 %v228
  %994 = vmatprep.subr.bf16.mxu0 0
  %995 = vmatpush1.bf16.msra.mxu0 %v229
  %996 = vmatprep.subr.bf16.mxu0 0
  %997 = vmatpush1.bf16.msra.mxu0 %v230
  %998 = vmatprep.subr.bf16.mxu0 0
  %999 = vmatpush1.bf16.msra.mxu0 %v231
  %1000 = vmatprep.subr.bf16.mxu0 0
  %1001 = vmatpush1.bf16.msra.mxu0 %v232
  %1002 = vmatprep.subr.bf16.mxu0 0
  %1003 = vmatpush1.bf16.msra.mxu0 %v233
  %1004 = vmatprep.subr.bf16.mxu0 0
  %1005 = vmatpush1.bf16.msra.mxu0 %v234
  %1006 = vmatprep.subr.bf16.mxu0 0
  %1007 = vmatpush1.bf16.msra.mxu0 %v235
  %1008 = vmatprep.subr.bf16.mxu0 0
  %1009 = vmatpush1.bf16.msra.mxu0 %v236
  %1010 = vmatprep.mubr.bf16.mxu0 %v754
  %1011 = vmatmul.mubr.bf16.gmra.mrb[0].mxu0 %v753
  %v1012 = vpop.f32.mrb[0].mxu0
  %v1013 = vadd.f32 0.0, %v1012
  %v1014 = vpop.f32.mrb[0].mxu0
  %v1015 = vpop.f32.mrb[0].mxu0
  %v1016 = vadd.f32 0.0, %v1015
  %v1017 = vpop.f32.mrb[0].mxu0
  %1018 = vmatprep.mubr.bf16.mxu0 %v767
  %1019 = vmatmul.mubr.bf16.gmra.mrb[0].mxu0 %v766
  %v1020 = vpop.f32.mrb[0].mxu0
  %v1021 = vadd.f32 0.0, %v1020
  %v1022 = vpop.f32.mrb[0].mxu0
  %v1023 = vpop.f32.mrb[0].mxu0
  %v1024 = vadd.f32 0.0, %v1023
  %v1025 = vpop.f32.mrb[0].mxu0
  %1026 = vmatprep.mubr.bf16.mxu0 %v780
  %1027 = vmatmul.mubr.bf16.gmra.mrb[0].mxu0 %v779
  %v1028 = vpop.f32.mrb[0].mxu0
  %v1029 = vadd.f32 0.0, %v1028
  %v1030 = vpop.f32.mrb[0].mxu0
  %v1031 = vpop.f32.mrb[0].mxu0
  %v1032 = vadd.f32 0.0, %v1031
  %v1033 = vpop.f32.mrb[0].mxu0
  %1034 = vmatprep.mubr.bf16.mxu0 %v793
  %1035 = vmatmul.mubr.bf16.gmra.mrb[0].mxu0 %v792
  %v1036 = vpop.f32.mrb[0].mxu0
  %v1037 = vadd.f32 0.0, %v1036
  %v1038 = vpop.f32.mrb[0].mxu0
  %v1039 = vpop.f32.mrb[0].mxu0
  %v1040 = vadd.f32 0.0, %v1039
  %v1041 = vpop.f32.mrb[0].mxu0
  %1042 = vmatprep.mubr.bf16.mxu0 %v806
  %1043 = vmatmul.mubr.bf16.gmra.mrb[0].mxu0 %v805
  %v1044 = vpop.f32.mrb[0].mxu0
  %v1045 = vadd.f32 0.0, %v1044
  %v1046 = vpop.f32.mrb[0].mxu0
  %v1047 = vpop.f32.mrb[0].mxu0
  %v1048 = vadd.f32 0.0, %v1047
  %v1049 = vpop.f32.mrb[0].mxu0
  %1050 = vmatprep.mubr.bf16.mxu0 %v819
  %1051 = vmatmul.mubr.bf16.gmra.mrb[0].mxu0 %v818
  %v1052 = vpop.f32.mrb[0].mxu0
  %v1053 = vadd.f32 0.0, %v1052
  %v1054 = vpop.f32.mrb[0].mxu0
  %v1055 = vpop.f32.mrb[0].mxu0
  %v1056 = vadd.f32 0.0, %v1055
  %v1057 = vpop.f32.mrb[0].mxu0
  %1058 = vmatprep.mubr.bf16.mxu0 %v832
  %1059 = vmatmul.mubr.bf16.gmra.mrb[0].mxu0 %v831
  %v1060 = vpop.f32.mrb[0].mxu0
  %v1061 = vadd.f32 0.0, %v1060
  %v1062 = vpop.f32.mrb[0].mxu0
  %v1063 = vpop.f32.mrb[0].mxu0
  %v1064 = vadd.f32 0.0, %v1063
  %v1065 = vpop.f32.mrb[0].mxu0
  %1066 = vmatprep.mubr.bf16.mxu0 %v845
  %1067 = vmatmul.mubr.bf16.gmra.mrb[0].mxu0 %v844
  %v1068 = vpop.f32.mrb[0].mxu0
  %v1069 = vadd.f32 0.0, %v1068
  %v1070 = vpop.f32.mrb[0].mxu0
  %v1071 = vpop.f32.mrb[0].mxu0
  %v1072 = vadd.f32 0.0, %v1071
  %v1073 = vpop.f32.mrb[0].mxu0
  %1074 = vdwg.mxu0
  %1075 = vmatprep.subr.bf16.mxu0 0
  %1076 = vmatpush1.bf16.msra.mxu0 %v237
  %1077 = vmatprep.subr.bf16.mxu0 0
  %1078 = vmatpush1.bf16.msra.mxu0 %v238
  %1079 = vmatprep.subr.bf16.mxu0 0
  %1080 = vmatpush1.bf16.msra.mxu0 %v239
  %1081 = vmatprep.subr.bf16.mxu0 0
  %1082 = vmatpush1.bf16.msra.mxu0 %v240
  %1083 = vmatprep.subr.bf16.mxu0 0
  %1084 = vmatpush1.bf16.msra.mxu0 %v241
  %1085 = vmatprep.subr.bf16.mxu0 0
  %1086 = vmatpush1.bf16.msra.mxu0 %v242
  %1087 = vmatprep.subr.bf16.mxu0 0
  %1088 = vmatpush1.bf16.msra.mxu0 %v243
  %1089 = vmatprep.subr.bf16.mxu0 0
  %1090 = vmatpush1.bf16.msra.mxu0 %v244
  %1091 = vmatprep.subr.bf16.mxu0 0
  %1092 = vmatpush1.bf16.msra.mxu0 %v245
  %1093 = vmatprep.subr.bf16.mxu0 0
  %1094 = vmatpush1.bf16.msra.mxu0 %v246
  %1095 = vmatprep.subr.bf16.mxu0 0
  %1096 = vmatpush1.bf16.msra.mxu0 %v247
  %1097 = vmatprep.subr.bf16.mxu0 0
  %1098 = vmatpush1.bf16.msra.mxu0 %v248
  %1099 = vmatprep.subr.bf16.mxu0 0
  %1100 = vmatpush1.bf16.msra.mxu0 %v249
  %1101 = vmatprep.subr.bf16.mxu0 0
  %1102 = vmatpush1.bf16.msra.mxu0 %v250
  %1103 = vmatprep.subr.bf16.mxu0 0
  %1104 = vmatpush1.bf16.msra.mxu0 %v251
  %1105 = vmatprep.subr.bf16.mxu0 0
  %1106 = vmatpush1.bf16.msra.mxu0 %v252
  %1107 = vmatprep.mubr.bf16.mxu0 %v756
  %1108 = vmatmul.mubr.bf16.gmra.mrb[0].mxu0 %v755
  %v1109 = vpop.f32.mrb[0].mxu0
  %v1110 = vadd.f32 %v1013, %v1109
  %v1111 = vpop.f32.mrb[0].mxu0
  %v1112 = vpop.f32.mrb[0].mxu0
  %v1113 = vadd.f32 %v1016, %v1112
  %v1114 = vpop.f32.mrb[0].mxu0
  %1115 = vmatprep.mubr.bf16.mxu0 %v769
  %1116 = vmatmul.mubr.bf16.gmra.mrb[0].mxu0 %v768
  %v1117 = vpop.f32.mrb[0].mxu0
  %v1118 = vadd.f32 %v1021, %v1117
  %v1119 = vpop.f32.mrb[0].mxu0
  %v1120 = vpop.f32.mrb[0].mxu0
  %v1121 = vadd.f32 %v1024, %v1120
  %v1122 = vpop.f32.mrb[0].mxu0
  %1123 = vmatprep.mubr.bf16.mxu0 %v782
  %1124 = vmatmul.mubr.bf16.gmra.mrb[0].mxu0 %v781
  %v1125 = vpop.f32.mrb[0].mxu0
  %v1126 = vadd.f32 %v1029, %v1125
  %v1127 = vpop.f32.mrb[0].mxu0
  %v1128 = vpop.f32.mrb[0].mxu0
  %v1129 = vadd.f32 %v1032, %v1128
  %v1130 = vpop.f32.mrb[0].mxu0
  %1131 = vmatprep.mubr.bf16.mxu0 %v795
  %1132 = vmatmul.mubr.bf16.gmra.mrb[0].mxu0 %v794
  %v1133 = vpop.f32.mrb[0].mxu0
  %v1134 = vadd.f32 %v1037, %v1133
  %v1135 = vpop.f32.mrb[0].mxu0
  %v1136 = vpop.f32.mrb[0].mxu0
  %v1137 = vadd.f32 %v1040, %v1136
  %v1138 = vpop.f32.mrb[0].mxu0
  %1139 = vmatprep.mubr.bf16.mxu0 %v808
  %1140 = vmatmul.mubr.bf16.gmra.mrb[0].mxu0 %v807
  %v1141 = vpop.f32.mrb[0].mxu0
  %v1142 = vadd.f32 %v1045, %v1141
  %v1143 = vpop.f32.mrb[0].mxu0
  %v1144 = vpop.f32.mrb[0].mxu0
  %v1145 = vadd.f32 %v1048, %v1144
  %v1146 = vpop.f32.mrb[0].mxu0
  %1147 = vmatprep.mubr.bf16.mxu0 %v821
  %1148 = vmatmul.mubr.bf16.gmra.mrb[0].mxu0 %v820
  %v1149 = vpop.f32.mrb[0].mxu0
  %v1150 = vadd.f32 %v1053, %v1149
  %v1151 = vpop.f32.mrb[0].mxu0
  %v1152 = vpop.f32.mrb[0].mxu0
  %v1153 = vadd.f32 %v1056, %v1152
  %v1154 = vpop.f32.mrb[0].mxu0
  %1155 = vmatprep.mubr.bf16.mxu0 %v834
  %1156 = vmatmul.mubr.bf16.gmra.mrb[0].mxu0 %v833
  %v1157 = vpop.f32.mrb[0].mxu0
  %v1158 = vadd.f32 %v1061, %v1157
  %v1159 = vpop.f32.mrb[0].mxu0
  %v1160 = vpop.f32.mrb[0].mxu0
  %v1161 = vadd.f32 %v1064, %v1160
  %v1162 = vpop.f32.mrb[0].mxu0
  %1163 = vmatprep.mubr.bf16.mxu0 %v847
  %1164 = vmatmul.mubr.bf16.gmra.mrb[0].mxu0 %v846
  %v1165 = vpop.f32.mrb[0].mxu0
  %v1166 = vadd.f32 %v1069, %v1165
  %v1167 = vpop.f32.mrb[0].mxu0
  %v1168 = vpop.f32.mrb[0].mxu0
  %v1169 = vadd.f32 %v1072, %v1168
  %v1170 = vpop.f32.mrb[0].mxu0
  %1171 = vdwg.mxu0
  %1172 = vmatprep.subr.bf16.mxu0 0
  %1173 = vmatpush1.bf16.msra.mxu0 %v253
  %1174 = vmatprep.subr.bf16.mxu0 0
  %1175 = vmatpush1.bf16.msra.mxu0 %v254
  %1176 = vmatprep.subr.bf16.mxu0 0
  %1177 = vmatpush1.bf16.msra.mxu0 %v255
  %1178 = vmatprep.subr.bf16.mxu0 0
  %1179 = vmatpush1.bf16.msra.mxu0 %v256
  %1180 = vmatprep.subr.bf16.mxu0 0
  %1181 = vmatpush1.bf16.msra.mxu0 %v257
  %1182 = vmatprep.subr.bf16.mxu0 0
  %1183 = vmatpush1.bf16.msra.mxu0 %v258
  %1184 = vmatprep.subr.bf16.mxu0 0
  %1185 = vmatpush1.bf16.msra.mxu0 %v259
  %1186 = vmatprep.subr.bf16.mxu0 0
  %1187 = vmatpush1.bf16.msra.mxu0 %v260
  %1188 = vmatprep.subr.bf16.mxu0 0
  %1189 = vmatpush1.bf16.msra.mxu0 %v261
  %1190 = vmatprep.subr.bf16.mxu0 0
  %1191 = vmatpush1.bf16.msra.mxu0 %v262
  %1192 = vmatprep.subr.bf16.mxu0 0
  %1193 = vmatpush1.bf16.msra.mxu0 %v263
  %1194 = vmatprep.subr.bf16.mxu0 0
  %1195 = vmatpush1.bf16.msra.mxu0 %v264
  %1196 = vmatprep.subr.bf16.mxu0 0
  %1197 = vmatpush1.bf16.msra.mxu0 %v265
  %1198 = vmatprep.subr.bf16.mxu0 0
  %1199 = vmatpush1.bf16.msra.mxu0 %v266
  %1200 = vmatprep.subr.bf16.mxu0 0
  %1201 = vmatpush1.bf16.msra.mxu0 %v267
  %1202 = vmatprep.subr.bf16.mxu0 0
  %1203 = vmatpush1.bf16.msra.mxu0 %v268
  %1204 = vmatprep.mubr.bf16.mxu0 %v758
  %1205 = vmatmul.mubr.bf16.gmra.mrb[0].mxu0 %v757
  %v1206 = vpop.f32.mrb[0].mxu0
  %v1207 = vadd.f32 %v1110, %v1206
  %v1208 = vpop.f32.mrb[0].mxu0
  %v1209 = vpop.f32.mrb[0].mxu0
  %v1210 = vadd.f32 %v1113, %v1209
  %v1211 = vpop.f32.mrb[0].mxu0
  %1212 = vmatprep.mubr.bf16.mxu0 %v771
  %1213 = vmatmul.mubr.bf16.gmra.mrb[0].mxu0 %v770
  %v1214 = vpop.f32.mrb[0].mxu0
  %v1215 = vadd.f32 %v1118, %v1214
  %v1216 = vpop.f32.mrb[0].mxu0
  %v1217 = vpop.f32.mrb[0].mxu0
  %v1218 = vadd.f32 %v1121, %v1217
  %v1219 = vpop.f32.mrb[0].mxu0
  %1220 = vmatprep.mubr.bf16.mxu0 %v784
  %1221 = vmatmul.mubr.bf16.gmra.mrb[0].mxu0 %v783
  %v1222 = vpop.f32.mrb[0].mxu0
  %v1223 = vadd.f32 %v1126, %v1222
  %v1224 = vpop.f32.mrb[0].mxu0
  %v1225 = vpop.f32.mrb[0].mxu0
  %v1226 = vadd.f32 %v1129, %v1225
  %v1227 = vpop.f32.mrb[0].mxu0
  %1228 = vmatprep.mubr.bf16.mxu0 %v797
  %1229 = vmatmul.mubr.bf16.gmra.mrb[0].mxu0 %v796
  %v1230 = vpop.f32.mrb[0].mxu0
  %v1231 = vadd.f32 %v1134, %v1230
  %v1232 = vpop.f32.mrb[0].mxu0
  %v1233 = vpop.f32.mrb[0].mxu0
  %v1234 = vadd.f32 %v1137, %v1233
  %v1235 = vpop.f32.mrb[0].mxu0
  %1236 = vmatprep.mubr.bf16.mxu0 %v810
  %1237 = vmatmul.mubr.bf16.gmra.mrb[0].mxu0 %v809
  %v1238 = vpop.f32.mrb[0].mxu0
  %v1239 = vadd.f32 %v1142, %v1238
  %v1240 = vpop.f32.mrb[0].mxu0
  %v1241 = vpop.f32.mrb[0].mxu0
  %v1242 = vadd.f32 %v1145, %v1241
  %v1243 = vpop.f32.mrb[0].mxu0
  %1244 = vmatprep.mubr.bf16.mxu0 %v823
  %1245 = vmatmul.mubr.bf16.gmra.mrb[0].mxu0 %v822
  %v1246 = vpop.f32.mrb[0].mxu0
  %v1247 = vadd.f32 %v1150, %v1246
  %v1248 = vpop.f32.mrb[0].mxu0
  %v1249 = vpop.f32.mrb[0].mxu0
  %v1250 = vadd.f32 %v1153, %v1249
  %v1251 = vpop.f32.mrb[0].mxu0
  %1252 = vmatprep.mubr.bf16.mxu0 %v836
  %1253 = vmatmul.mubr.bf16.gmra.mrb[0].mxu0 %v835
  %v1254 = vpop.f32.mrb[0].mxu0
  %v1255 = vadd.f32 %v1158, %v1254
  %v1256 = vpop.f32.mrb[0].mxu0
  %v1257 = vpop.f32.mrb[0].mxu0
  %v1258 = vadd.f32 %v1161, %v1257
  %v1259 = vpop.f32.mrb[0].mxu0
  %1260 = vmatprep.mubr.bf16.mxu0 %v849
  %1261 = vmatmul.mubr.bf16.gmra.mrb[0].mxu0 %v848
  %v1262 = vpop.f32.mrb[0].mxu0
  %v1263 = vadd.f32 %v1166, %v1262
  %v1264 = vpop.f32.mrb[0].mxu0
  %v1265 = vpop.f32.mrb[0].mxu0
  %v1266 = vadd.f32 %v1169, %v1265
  %v1267 = vpop.f32.mrb[0].mxu0
  %1268 = vdwg.mxu0
  %1269 = vmatprep.subr.bf16.mxu0 0
  %1270 = vmatpush1.bf16.msra.mxu0 %v269
  %1271 = vmatprep.subr.bf16.mxu0 0
  %1272 = vmatpush1.bf16.msra.mxu0 %v270
  %1273 = vmatprep.subr.bf16.mxu0 0
  %1274 = vmatpush1.bf16.msra.mxu0 %v271
  %1275 = vmatprep.subr.bf16.mxu0 0
  %1276 = vmatpush1.bf16.msra.mxu0 %v272
  %1277 = vmatprep.subr.bf16.mxu0 0
  %1278 = vmatpush1.bf16.msra.mxu0 %v273
  %1279 = vmatprep.subr.bf16.mxu0 0
  %1280 = vmatpush1.bf16.msra.mxu0 %v274
  %1281 = vmatprep.subr.bf16.mxu0 0
  %1282 = vmatpush1.bf16.msra.mxu0 %v275
  %1283 = vmatprep.subr.bf16.mxu0 0
  %1284 = vmatpush1.bf16.msra.mxu0 %v276
  %1285 = vmatprep.subr.bf16.mxu0 0
  %1286 = vmatpush1.bf16.msra.mxu0 %v277
  %1287 = vmatprep.subr.bf16.mxu0 0
  %1288 = vmatpush1.bf16.msra.mxu0 %v278
  %1289 = vmatprep.subr.bf16.mxu0 0
  %1290 = vmatpush1.bf16.msra.mxu0 %v279
  %1291 = vmatprep.subr.bf16.mxu0 0
  %1292 = vmatpush1.bf16.msra.mxu0 %v280
  %1293 = vmatprep.subr.bf16.mxu0 0
  %1294 = vmatpush1.bf16.msra.mxu0 %v281
  %1295 = vmatprep.subr.bf16.mxu0 0
  %1296 = vmatpush1.bf16.msra.mxu0 %v282
  %1297 = vmatprep.subr.bf16.mxu0 0
  %1298 = vmatpush1.bf16.msra.mxu0 %v283
  %1299 = vmatprep.subr.bf16.mxu0 0
  %1300 = vmatpush1.bf16.msra.mxu0 %v284
  %1301 = vmatprep.mubr.bf16.mxu0 %v760
  %1302 = vmatmul.mubr.bf16.gmra.mrb[0].mxu0 %v759
  %v1303 = vpop.f32.mrb[0].mxu0
  %v1304 = vadd.f32 %v1207, %v1303
  %v1305 = vpop.f32.mrb[0].mxu0
  %v1306 = vpop.f32.mrb[0].mxu0
  %v1307 = vadd.f32 %v1210, %v1306
  %v1308 = vpop.f32.mrb[0].mxu0
  %1309 = vmatprep.mubr.bf16.mxu0 %v773
  %1310 = vmatmul.mubr.bf16.gmra.mrb[0].mxu0 %v772
  %v1311 = vpop.f32.mrb[0].mxu0
  %v1312 = vadd.f32 %v1215, %v1311
  %v1313 = vpop.f32.mrb[0].mxu0
  %v1314 = vpop.f32.mrb[0].mxu0
  %v1315 = vadd.f32 %v1218, %v1314
  %v1316 = vpop.f32.mrb[0].mxu0
  %1317 = vmatprep.mubr.bf16.mxu0 %v786
  %1318 = vmatmul.mubr.bf16.gmra.mrb[0].mxu0 %v785
  %v1319 = vpop.f32.mrb[0].mxu0
  %v1320 = vadd.f32 %v1223, %v1319
  %v1321 = vpop.f32.mrb[0].mxu0
  %v1322 = vpop.f32.mrb[0].mxu0
  %v1323 = vadd.f32 %v1226, %v1322
  %v1324 = vpop.f32.mrb[0].mxu0
  %1325 = vmatprep.mubr.bf16.mxu0 %v799
  %1326 = vmatmul.mubr.bf16.gmra.mrb[0].mxu0 %v798
  %v1327 = vpop.f32.mrb[0].mxu0
  %v1328 = vadd.f32 %v1231, %v1327
  %v1329 = vpop.f32.mrb[0].mxu0
  %v1330 = vpop.f32.mrb[0].mxu0
  %v1331 = vadd.f32 %v1234, %v1330
  %v1332 = vpop.f32.mrb[0].mxu0
  %1333 = vmatprep.mubr.bf16.mxu0 %v812
  %1334 = vmatmul.mubr.bf16.gmra.mrb[0].mxu0 %v811
  %v1335 = vpop.f32.mrb[0].mxu0
  %v1336 = vadd.f32 %v1239, %v1335
  %v1337 = vpop.f32.mrb[0].mxu0
  %v1338 = vpop.f32.mrb[0].mxu0
  %v1339 = vadd.f32 %v1242, %v1338
  %v1340 = vpop.f32.mrb[0].mxu0
  %1341 = vmatprep.mubr.bf16.mxu0 %v825
  %1342 = vmatmul.mubr.bf16.gmra.mrb[0].mxu0 %v824
  %v1343 = vpop.f32.mrb[0].mxu0
  %v1344 = vadd.f32 %v1247, %v1343
  %v1345 = vpop.f32.mrb[0].mxu0
  %v1346 = vpop.f32.mrb[0].mxu0
  %v1347 = vadd.f32 %v1250, %v1346
  %v1348 = vpop.f32.mrb[0].mxu0
  %1349 = vmatprep.mubr.bf16.mxu0 %v838
  %1350 = vmatmul.mubr.bf16.gmra.mrb[0].mxu0 %v837
  %v1351 = vpop.f32.mrb[0].mxu0
  %v1352 = vadd.f32 %v1255, %v1351
  %v1353 = vpop.f32.mrb[0].mxu0
  %v1354 = vpop.f32.mrb[0].mxu0
  %v1355 = vadd.f32 %v1258, %v1354
  %v1356 = vpop.f32.mrb[0].mxu0
  %1357 = vmatprep.mubr.bf16.mxu0 %v851
  %1358 = vmatmul.mubr.bf16.gmra.mrb[0].mxu0 %v850
  %v1359 = vpop.f32.mrb[0].mxu0
  %v1360 = vadd.f32 %v1263, %v1359
  %v1361 = vpop.f32.mrb[0].mxu0
  %v1362 = vpop.f32.mrb[0].mxu0
  %v1363 = vadd.f32 %v1266, %v1362
  %v1364 = vpop.f32.mrb[0].mxu0
  %1365 = vdwg.mxu0
  %1366 = vmatprep.subr.bf16.mxu0 0
  %1367 = vmatpush1.bf16.msra.mxu0 %v285
  %1368 = vmatprep.subr.bf16.mxu0 0
  %1369 = vmatpush1.bf16.msra.mxu0 %v286
  %1370 = vmatprep.subr.bf16.mxu0 0
  %1371 = vmatpush1.bf16.msra.mxu0 %v287
  %1372 = vmatprep.subr.bf16.mxu0 0
  %1373 = vmatpush1.bf16.msra.mxu0 %v288
  %1374 = vmatprep.subr.bf16.mxu0 0
  %1375 = vmatpush1.bf16.msra.mxu0 %v289
  %1376 = vmatprep.subr.bf16.mxu0 0
  %1377 = vmatpush1.bf16.msra.mxu0 %v290
  %1378 = vmatprep.subr.bf16.mxu0 0
  %1379 = vmatpush1.bf16.msra.mxu0 %v291
  %1380 = vmatprep.subr.bf16.mxu0 0
  %1381 = vmatpush1.bf16.msra.mxu0 %v292
  %1382 = vmatprep.subr.bf16.mxu0 0
  %1383 = vmatpush1.bf16.msra.mxu0 %v293
  %1384 = vmatprep.subr.bf16.mxu0 0
  %1385 = vmatpush1.bf16.msra.mxu0 %v294
  %1386 = vmatprep.subr.bf16.mxu0 0
  %1387 = vmatpush1.bf16.msra.mxu0 %v295
  %1388 = vmatprep.subr.bf16.mxu0 0
  %1389 = vmatpush1.bf16.msra.mxu0 %v296
  %1390 = vmatprep.subr.bf16.mxu0 0
  %1391 = vmatpush1.bf16.msra.mxu0 %v297
  %1392 = vmatprep.subr.bf16.mxu0 0
  %1393 = vmatpush1.bf16.msra.mxu0 %v298
  %1394 = vmatprep.subr.bf16.mxu0 0
  %1395 = vmatpush1.bf16.msra.mxu0 %v299
  %1396 = vmatprep.subr.bf16.mxu0 0
  %1397 = vmatpush1.bf16.msra.mxu0 %v300
  %1398 = vmatprep.mubr.bf16.mxu0 %v762
  %1399 = vmatmul.mubr.bf16.gmra.mrb[0].mxu0 %v761
  %v1400 = vpop.f32.mrb[0].mxu0
  %v1401 = vadd.f32 %v1304, %v1400
  %v1402 = vpop.f32.mrb[0].mxu0
  %v1403 = vpop.f32.mrb[0].mxu0
  %v1404 = vadd.f32 %v1307, %v1403
  %v1405 = vpop.f32.mrb[0].mxu0
  %1406 = vmatprep.mubr.bf16.mxu0 %v775
  %1407 = vmatmul.mubr.bf16.gmra.mrb[0].mxu0 %v774
  %v1408 = vpop.f32.mrb[0].mxu0
  %v1409 = vadd.f32 %v1312, %v1408
  %v1410 = vpop.f32.mrb[0].mxu0
  %v1411 = vpop.f32.mrb[0].mxu0
  %v1412 = vadd.f32 %v1315, %v1411
  %v1413 = vpop.f32.mrb[0].mxu0
  %1414 = vmatprep.mubr.bf16.mxu0 %v788
  %1415 = vmatmul.mubr.bf16.gmra.mrb[0].mxu0 %v787
  %v1416 = vpop.f32.mrb[0].mxu0
  %v1417 = vadd.f32 %v1320, %v1416
  %v1418 = vpop.f32.mrb[0].mxu0
  %v1419 = vpop.f32.mrb[0].mxu0
  %v1420 = vadd.f32 %v1323, %v1419
  %v1421 = vpop.f32.mrb[0].mxu0
  %1422 = vmatprep.mubr.bf16.mxu0 %v801
  %1423 = vmatmul.mubr.bf16.gmra.mrb[0].mxu0 %v800
  %v1424 = vpop.f32.mrb[0].mxu0
  %v1425 = vadd.f32 %v1328, %v1424
  %v1426 = vpop.f32.mrb[0].mxu0
  %v1427 = vpop.f32.mrb[0].mxu0
  %v1428 = vadd.f32 %v1331, %v1427
  %v1429 = vpop.f32.mrb[0].mxu0
  %1430 = vmatprep.mubr.bf16.mxu0 %v814
  %1431 = vmatmul.mubr.bf16.gmra.mrb[0].mxu0 %v813
  %v1432 = vpop.f32.mrb[0].mxu0
  %v1433 = vadd.f32 %v1336, %v1432
  %v1434 = vpop.f32.mrb[0].mxu0
  %v1435 = vpop.f32.mrb[0].mxu0
  %v1436 = vadd.f32 %v1339, %v1435
  %v1437 = vpop.f32.mrb[0].mxu0
  %1438 = vmatprep.mubr.bf16.mxu0 %v827
  %1439 = vmatmul.mubr.bf16.gmra.mrb[0].mxu0 %v826
  %v1440 = vpop.f32.mrb[0].mxu0
  %v1441 = vadd.f32 %v1344, %v1440
  %v1442 = vpop.f32.mrb[0].mxu0
  %v1443 = vpop.f32.mrb[0].mxu0
  %v1444 = vadd.f32 %v1347, %v1443
  %v1445 = vpop.f32.mrb[0].mxu0
  %1446 = vmatprep.mubr.bf16.mxu0 %v840
  %1447 = vmatmul.mubr.bf16.gmra.mrb[0].mxu0 %v839
  %v1448 = vpop.f32.mrb[0].mxu0
  %v1449 = vadd.f32 %v1352, %v1448
  %v1450 = vpop.f32.mrb[0].mxu0
  %v1451 = vpop.f32.mrb[0].mxu0
  %v1452 = vadd.f32 %v1355, %v1451
  %v1453 = vpop.f32.mrb[0].mxu0
  %1454 = vmatprep.mubr.bf16.mxu0 %v853
  %1455 = vmatmul.mubr.bf16.gmra.mrb[0].mxu0 %v852
  %v1456 = vpop.f32.mrb[0].mxu0
  %v1457 = vadd.f32 %v1360, %v1456
  %v1458 = vpop.f32.mrb[0].mxu0
  %v1459 = vpop.f32.mrb[0].mxu0
  %v1460 = vadd.f32 %v1363, %v1459
  %v1461 = vpop.f32.mrb[0].mxu0
  %1462 = vdwg.mxu0
  %1463 = vmatprep.subr.bf16.mxu0 0
  %1464 = vmatpush1.bf16.msra.mxu0 %v301
  %1465 = vmatprep.subr.bf16.mxu0 0
  %1466 = vmatpush1.bf16.msra.mxu0 %v302
  %1467 = vmatprep.subr.bf16.mxu0 0
  %1468 = vmatpush1.bf16.msra.mxu0 %v303
  %1469 = vmatprep.subr.bf16.mxu0 0
  %1470 = vmatpush1.bf16.msra.mxu0 %v304
  %1471 = vmatprep.subr.bf16.mxu0 0
  %1472 = vmatpush1.bf16.msra.mxu0 %v305
  %1473 = vmatprep.subr.bf16.mxu0 0
  %1474 = vmatpush1.bf16.msra.mxu0 %v306
  %1475 = vmatprep.subr.bf16.mxu0 0
  %1476 = vmatpush1.bf16.msra.mxu0 %v307
  %1477 = vmatprep.subr.bf16.mxu0 0
  %1478 = vmatpush1.bf16.msra.mxu0 %v308
  %1479 = vmatprep.subr.bf16.mxu0 0
  %1480 = vmatpush1.bf16.msra.mxu0 %v309
  %1481 = vmatprep.subr.bf16.mxu0 0
  %1482 = vmatpush1.bf16.msra.mxu0 %v310
  %1483 = vmatprep.subr.bf16.mxu0 0
  %1484 = vmatpush1.bf16.msra.mxu0 %v311
  %1485 = vmatprep.subr.bf16.mxu0 0
  %1486 = vmatpush1.bf16.msra.mxu0 %v312
  %1487 = vmatprep.subr.bf16.mxu0 0
  %1488 = vmatpush1.bf16.msra.mxu0 %v313
  %1489 = vmatprep.subr.bf16.mxu0 0
  %1490 = vmatpush1.bf16.msra.mxu0 %v314
  %1491 = vmatprep.subr.bf16.mxu0 0
  %1492 = vmatpush1.bf16.msra.mxu0 %v315
  %1493 = vmatprep.subr.bf16.mxu0 0
  %1494 = vmatpush1.bf16.msra.mxu0 %v316
  %1495 = vmatprep.mubr.bf16.mxu0 %v764
  %1496 = vmatmul.mubr.bf16.gmra.mrb[0].mxu0 %v763
  %v1497 = vpop.f32.mrb[0].mxu0
  %v1498 = vadd.f32 %v1401, %v1497
  %v1499 = vpop.f32.mrb[0].mxu0
  %v1500 = vpop.f32.mrb[0].mxu0
  %v1501 = vadd.f32 %v1404, %v1500
  %v1502 = vpop.f32.mrb[0].mxu0
  %1503 = vmatprep.mubr.bf16.mxu0 %v777
  %1504 = vmatmul.mubr.bf16.gmra.mrb[0].mxu0 %v776
  %v1505 = vpop.f32.mrb[0].mxu0
  %v1506 = vadd.f32 %v1409, %v1505
  %v1507 = vpop.f32.mrb[0].mxu0
  %v1508 = vpop.f32.mrb[0].mxu0
  %v1509 = vadd.f32 %v1412, %v1508
  %v1510 = vpop.f32.mrb[0].mxu0
  %1511 = vmatprep.mubr.bf16.mxu0 %v790
  %1512 = vmatmul.mubr.bf16.gmra.mrb[0].mxu0 %v789
  %v1513 = vpop.f32.mrb[0].mxu0
  %v1514 = vadd.f32 %v1417, %v1513
  %v1515 = vpop.f32.mrb[0].mxu0
  %v1516 = vpop.f32.mrb[0].mxu0
  %v1517 = vadd.f32 %v1420, %v1516
  %v1518 = vpop.f32.mrb[0].mxu0
  %1519 = vmatprep.mubr.bf16.mxu0 %v803
  %1520 = vmatmul.mubr.bf16.gmra.mrb[0].mxu0 %v802
  %v1521 = vpop.f32.mrb[0].mxu0
  %v1522 = vadd.f32 %v1425, %v1521
  %v1523 = vpop.f32.mrb[0].mxu0
  %v1524 = vpop.f32.mrb[0].mxu0
  %v1525 = vadd.f32 %v1428, %v1524
  %v1526 = vpop.f32.mrb[0].mxu0
  %1527 = vmatprep.mubr.bf16.mxu0 %v816
  %1528 = vmatmul.mubr.bf16.gmra.mrb[0].mxu0 %v815
  %v1529 = vpop.f32.mrb[0].mxu0
  %v1530 = vadd.f32 %v1433, %v1529
  %v1531 = vpop.f32.mrb[0].mxu0
  %v1532 = vpop.f32.mrb[0].mxu0
  %v1533 = vadd.f32 %v1436, %v1532
  %v1534 = vpop.f32.mrb[0].mxu0
  %1535 = vmatprep.mubr.bf16.mxu0 %v829
  %1536 = vmatmul.mubr.bf16.gmra.mrb[0].mxu0 %v828
  %v1537 = vpop.f32.mrb[0].mxu0
  %v1538 = vadd.f32 %v1441, %v1537
  %v1539 = vpop.f32.mrb[0].mxu0
  %v1540 = vpop.f32.mrb[0].mxu0
  %v1541 = vadd.f32 %v1444, %v1540
  %v1542 = vpop.f32.mrb[0].mxu0
  %1543 = vmatprep.mubr.bf16.mxu0 %v842
  %1544 = vmatmul.mubr.bf16.gmra.mrb[0].mxu0 %v841
  %v1545 = vpop.f32.mrb[0].mxu0
  %v1546 = vadd.f32 %v1449, %v1545
  %v1547 = vpop.f32.mrb[0].mxu0
  %v1548 = vpop.f32.mrb[0].mxu0
  %v1549 = vadd.f32 %v1452, %v1548
  %v1550 = vpop.f32.mrb[0].mxu0
  %1551 = vmatprep.mubr.bf16.mxu0 %v855
  %1552 = vmatmul.mubr.bf16.gmra.mrb[0].mxu0 %v854
  %v1553 = vpop.f32.mrb[0].mxu0
  %v1554 = vadd.f32 %v1457, %v1553
  %v1555 = vpop.f32.mrb[0].mxu0
  %v1556 = vpop.f32.mrb[0].mxu0
  %v1557 = vadd.f32 %v1460, %v1556
  %v1558 = vpop.f32.mrb[0].mxu0
  %1559 = vdwg.mxu0
  %1560 = vmatprep.subr.bf16.mxu0 0
  %1561 = vmatpush1.bf16.msra.mxu0 %v317
  %1562 = vmatprep.subr.bf16.mxu0 0
  %1563 = vmatpush1.bf16.msra.mxu0 %v318
  %1564 = vmatprep.subr.bf16.mxu0 0
  %1565 = vmatpush1.bf16.msra.mxu0 %v319
  %1566 = vmatprep.subr.bf16.mxu0 0
  %1567 = vmatpush1.bf16.msra.mxu0 %v320
  %1568 = vmatprep.subr.bf16.mxu0 0
  %1569 = vmatpush1.bf16.msra.mxu0 0
  %1570 = vmatprep.subr.bf16.mxu0 0
  %1571 = vmatpush1.bf16.msra.mxu0 0
  %1572 = vmatprep.subr.bf16.mxu0 0
  %1573 = vmatpush1.bf16.msra.mxu0 0
  %1574 = vmatprep.subr.bf16.mxu0 0
  %1575 = vmatpush1.bf16.msra.mxu0 0
  %1576 = vmatprep.subr.bf16.mxu0 0
  %1577 = vmatpush1.bf16.msra.mxu0 0
  %1578 = vmatprep.subr.bf16.mxu0 0
  %1579 = vmatpush1.bf16.msra.mxu0 0
  %1580 = vmatprep.subr.bf16.mxu0 0
  %1581 = vmatpush1.bf16.msra.mxu0 0
  %1582 = vmatprep.subr.bf16.mxu0 0
  %1583 = vmatpush1.bf16.msra.mxu0 0
  %1584 = vmatprep.subr.bf16.mxu0 0
  %1585 = vmatpush1.bf16.msra.mxu0 0
  %1586 = vmatprep.subr.bf16.mxu0 0
  %1587 = vmatpush1.bf16.msra.mxu0 0
  %1588 = vmatprep.subr.bf16.mxu0 0
  %1589 = vmatpush1.bf16.msra.mxu0 0
  %1590 = vmatprep.subr.bf16.mxu0 0
  %1591 = vmatpush1.bf16.msra.mxu0 0
  %1592 = vmatprep.mubr.bf16.mxu0 0
  %1593 = vmatmul.mubr.bf16.gmra.mrb[0].mxu0 %v955
  %v1594 = vpop.f32.mrb[0].mxu0
  %v1595 = vadd.f32 %v1498, %v1594
  %v1596 = vpop.f32.mrb[0].mxu0
  %v1597 = vpop.f32.mrb[0].mxu0
  %v1598 = vadd.f32 %v1501, %v1597
  %v1599 = vpop.f32.mrb[0].mxu0
  %1600 = vmatprep.mubr.bf16.mxu0 0
  %1601 = vmatmul.mubr.bf16.gmra.mrb[0].mxu0 %v958
  %v1602 = vpop.f32.mrb[0].mxu0
  %v1603 = vadd.f32 %v1506, %v1602
  %v1604 = vpop.f32.mrb[0].mxu0
  %v1605 = vpop.f32.mrb[0].mxu0
  %v1606 = vadd.f32 %v1509, %v1605
  %v1607 = vpop.f32.mrb[0].mxu0
  %1608 = vmatprep.mubr.bf16.mxu0 0
  %1609 = vmatmul.mubr.bf16.gmra.mrb[0].mxu0 %v961
  %v1610 = vpop.f32.mrb[0].mxu0
  %v1611 = vadd.f32 %v1514, %v1610
  %v1612 = vpop.f32.mrb[0].mxu0
  %v1613 = vpop.f32.mrb[0].mxu0
  %v1614 = vadd.f32 %v1517, %v1613
  %v1615 = vpop.f32.mrb[0].mxu0
  %1616 = vmatprep.mubr.bf16.mxu0 0
  %1617 = vmatmul.mubr.bf16.gmra.mrb[0].mxu0 %v964
  %v1618 = vpop.f32.mrb[0].mxu0
  %v1619 = vadd.f32 %v1522, %v1618
  %v1620 = vpop.f32.mrb[0].mxu0
  %v1621 = vpop.f32.mrb[0].mxu0
  %v1622 = vadd.f32 %v1525, %v1621
  %v1623 = vpop.f32.mrb[0].mxu0
  %1624 = vmatprep.mubr.bf16.mxu0 0
  %1625 = vmatmul.mubr.bf16.gmra.mrb[0].mxu0 %v967
  %v1626 = vpop.f32.mrb[0].mxu0
  %v1627 = vadd.f32 %v1530, %v1626
  %v1628 = vpop.f32.mrb[0].mxu0
  %v1629 = vpop.f32.mrb[0].mxu0
  %v1630 = vadd.f32 %v1533, %v1629
  %v1631 = vpop.f32.mrb[0].mxu0
  %1632 = vmatprep.mubr.bf16.mxu0 0
  %1633 = vmatmul.mubr.bf16.gmra.mrb[0].mxu0 %v970
  %v1634 = vpop.f32.mrb[0].mxu0
  %v1635 = vadd.f32 %v1538, %v1634
  %v1636 = vpop.f32.mrb[0].mxu0
  %v1637 = vpop.f32.mrb[0].mxu0
  %v1638 = vadd.f32 %v1541, %v1637
  %v1639 = vpop.f32.mrb[0].mxu0
  %1640 = vmatprep.mubr.bf16.mxu0 0
  %1641 = vmatmul.mubr.bf16.gmra.mrb[0].mxu0 %v973
  %v1642 = vpop.f32.mrb[0].mxu0
  %v1643 = vadd.f32 %v1546, %v1642
  %v1644 = vpop.f32.mrb[0].mxu0
  %v1645 = vpop.f32.mrb[0].mxu0
  %v1646 = vadd.f32 %v1549, %v1645
  %v1647 = vpop.f32.mrb[0].mxu0
  %1648 = vmatprep.mubr.bf16.mxu0 0
  %1649 = vmatmul.mubr.bf16.gmra.mrb[0].mxu0 %v976
  %v1650 = vpop.f32.mrb[0].mxu0
  %v1651 = vadd.f32 %v1554, %v1650
  %v1652 = vpop.f32.mrb[0].mxu0
  %v1653 = vpop.f32.mrb[0].mxu0
  %v1654 = vadd.f32 %v1557, %v1653
  %v1655 = vpop.f32.mrb[0].mxu0
  %1656 = vdwg.mxu0
  %vm1657 = vcmask 400384
  %v1658 = vsel %vm1657, %v1595, 0.0
  %1659 = vadd.xlane.f32.xlu0 %v1658
  %v1660 = vpop.xlane.xlu0 %1659
  %v1661 = vsel %vm1657, %v1598, 0.0
  %1662 = vadd.xlane.f32.xlu0 %v1661
  %v1663 = vpop.xlane.xlu0 %1662
  %v1664 = vsel %vm1657, %v1603, 0.0
  %1665 = vadd.xlane.f32.xlu0 %v1664
  %v1666 = vpop.xlane.xlu0 %1665
  %v1667 = vsel %vm1657, %v1606, 0.0
  %1668 = vadd.xlane.f32.xlu0 %v1667
  %v1669 = vpop.xlane.xlu0 %1668
  %v1670 = vsel %vm1657, %v1611, 0.0
  %1671 = vadd.xlane.f32.xlu0 %v1670
  %v1672 = vpop.xlane.xlu0 %1671
  %v1673 = vsel %vm1657, %v1614, 0.0
  %1674 = vadd.xlane.f32.xlu0 %v1673
  %v1675 = vpop.xlane.xlu0 %1674
  %v1676 = vsel %vm1657, %v1619, 0.0
  %1677 = vadd.xlane.f32.xlu0 %v1676
  %v1678 = vpop.xlane.xlu0 %1677
  %v1679 = vsel %vm1657, %v1622, 0.0
  %1680 = vadd.xlane.f32.xlu0 %v1679
  %v1681 = vpop.xlane.xlu0 %1680
  %v1682 = vsel %vm1657, %v1627, 0.0
  %1683 = vadd.xlane.f32.xlu0 %v1682
  %v1684 = vpop.xlane.xlu0 %1683
  %v1685 = vsel %vm1657, %v1630, 0.0
  %1686 = vadd.xlane.f32.xlu0 %v1685
  %v1687 = vpop.xlane.xlu0 %1686
  %v1688 = vsel %vm1657, %v1635, 0.0
  %1689 = vadd.xlane.f32.xlu0 %v1688
  %v1690 = vpop.xlane.xlu0 %1689
  %v1691 = vsel %vm1657, %v1638, 0.0
  %1692 = vadd.xlane.f32.xlu0 %v1691
  %v1693 = vpop.xlane.xlu0 %1692
  %v1694 = vsel %vm1657, %v1643, 0.0
  %1695 = vadd.xlane.f32.xlu0 %v1694
  %v1696 = vpop.xlane.xlu0 %1695
  %v1697 = vsel %vm1657, %v1646, 0.0
  %1698 = vadd.xlane.f32.xlu0 %v1697
  %v1699 = vpop.xlane.xlu0 %1698
  %v1700 = vsel %vm1657, %v1651, 0.0
  %1701 = vadd.xlane.f32.xlu0 %v1700
  %v1702 = vpop.xlane.xlu0 %1701
  %v1703 = vsel %vm1657, %v1654, 0.0
  %1704 = vadd.xlane.f32.xlu0 %v1703
  %v1705 = vpop.xlane.xlu0 %1704
  %v1706 = vmul.f32 %v1595, %v1595
  %v1707 = vmul.f32 %v1598, %v1598
  %v1708 = vmul.f32 %v1603, %v1603
  %v1709 = vmul.f32 %v1606, %v1606
  %v1710 = vmul.f32 %v1611, %v1611
  %v1711 = vmul.f32 %v1614, %v1614
  %v1712 = vmul.f32 %v1619, %v1619
  %v1713 = vmul.f32 %v1622, %v1622
  %v1714 = vmul.f32 %v1627, %v1627
  %v1715 = vmul.f32 %v1630, %v1630
  %v1716 = vmul.f32 %v1635, %v1635
  %v1717 = vmul.f32 %v1638, %v1638
  %v1718 = vmul.f32 %v1643, %v1643
  %v1719 = vmul.f32 %v1646, %v1646
  %v1720 = vmul.f32 %v1651, %v1651
  %v1721 = vmul.f32 %v1654, %v1654
  %v1722 = vsel %vm1657, %v1706, 0.0
  %1723 = vadd.xlane.f32.xlu0 %v1722
  %v1724 = vpop.xlane.xlu0 %1723
  %v1725 = vsel %vm1657, %v1707, 0.0
  %1726 = vadd.xlane.f32.xlu0 %v1725
  %v1727 = vpop.xlane.xlu0 %1726
  %v1728 = vsel %vm1657, %v1708, 0.0
  %1729 = vadd.xlane.f32.xlu0 %v1728
  %v1730 = vpop.xlane.xlu0 %1729
  %v1731 = vsel %vm1657, %v1709, 0.0
  %1732 = vadd.xlane.f32.xlu0 %v1731
  %v1733 = vpop.xlane.xlu0 %1732
  %v1734 = vsel %vm1657, %v1710, 0.0
  %1735 = vadd.xlane.f32.xlu0 %v1734
  %v1736 = vpop.xlane.xlu0 %1735
  %v1737 = vsel %vm1657, %v1711, 0.0
  %1738 = vadd.xlane.f32.xlu0 %v1737
  %v1739 = vpop.xlane.xlu0 %1738
  %v1740 = vsel %vm1657, %v1712, 0.0
  %1741 = vadd.xlane.f32.xlu0 %v1740
  %v1742 = vpop.xlane.xlu0 %1741
  %v1743 = vsel %vm1657, %v1713, 0.0
  %1744 = vadd.xlane.f32.xlu0 %v1743
  %v1745 = vpop.xlane.xlu0 %1744
  %v1746 = vsel %vm1657, %v1714, 0.0
  %1747 = vadd.xlane.f32.xlu0 %v1746
  %v1748 = vpop.xlane.xlu0 %1747
  %v1749 = vsel %vm1657, %v1715, 0.0
  %1750 = vadd.xlane.f32.xlu0 %v1749
  %v1751 = vpop.xlane.xlu0 %1750
  %v1752 = vsel %vm1657, %v1716, 0.0
  %1753 = vadd.xlane.f32.xlu0 %v1752
  %v1754 = vpop.xlane.xlu0 %1753
  %v1755 = vsel %vm1657, %v1717, 0.0
  %1756 = vadd.xlane.f32.xlu0 %v1755
  %v1757 = vpop.xlane.xlu0 %1756
  %v1758 = vsel %vm1657, %v1718, 0.0
  %1759 = vadd.xlane.f32.xlu0 %v1758
  %v1760 = vpop.xlane.xlu0 %1759
  %v1761 = vsel %vm1657, %v1719, 0.0
  %1762 = vadd.xlane.f32.xlu0 %v1761
  %v1763 = vpop.xlane.xlu0 %1762
  %v1764 = vsel %vm1657, %v1720, 0.0
  %1765 = vadd.xlane.f32.xlu0 %v1764
  %v1766 = vpop.xlane.xlu0 %1765
  %v1767 = vsel %vm1657, %v1721, 0.0
  %1768 = vadd.xlane.f32.xlu0 %v1767
  %v1769 = vpop.xlane.xlu0 %1768
  %v1770 = vmul.f32 %v1660, 0.020408163
  %v1771 = vmul.f32 %v1663, 0.020408163
  %v1772 = vmul.f32 %v1666, 0.020408163
  %v1773 = vmul.f32 %v1669, 0.020408163
  %v1774 = vmul.f32 %v1672, 0.020408163
  %v1775 = vmul.f32 %v1675, 0.020408163
  %v1776 = vmul.f32 %v1678, 0.020408163
  %v1777 = vmul.f32 %v1681, 0.020408163
  %v1778 = vmul.f32 %v1684, 0.020408163
  %v1779 = vmul.f32 %v1687, 0.020408163
  %v1780 = vmul.f32 %v1690, 0.020408163
  %v1781 = vmul.f32 %v1693, 0.020408163
  %v1782 = vmul.f32 %v1696, 0.020408163
  %v1783 = vmul.f32 %v1699, 0.020408163
  %v1784 = vmul.f32 %v1702, 0.020408163
  %v1785 = vmul.f32 %v1705, 0.020408163
  %v1786 = vmul.f32 %v1724, 0.020408163
  %v1787 = vmul.f32 %v1727, 0.020408163
  %v1788 = vmul.f32 %v1730, 0.020408163
  %v1789 = vmul.f32 %v1733, 0.020408163
  %v1790 = vmul.f32 %v1736, 0.020408163
  %v1791 = vmul.f32 %v1739, 0.020408163
  %v1792 = vmul.f32 %v1742, 0.020408163
  %v1793 = vmul.f32 %v1745, 0.020408163
  %v1794 = vmul.f32 %v1748, 0.020408163
  %v1795 = vmul.f32 %v1751, 0.020408163
  %v1796 = vmul.f32 %v1754, 0.020408163
  %v1797 = vmul.f32 %v1757, 0.020408163
  %v1798 = vmul.f32 %v1760, 0.020408163
  %v1799 = vmul.f32 %v1763, 0.020408163
  %v1800 = vmul.f32 %v1766, 0.020408163
  %v1801 = vmul.f32 %v1769, 0.020408163
  %v1802 = vmul.f32 %v1770, %v1770
  %v1803 = vmul.f32 %v1771, %v1771
  %v1804 = vmul.f32 %v1772, %v1772
  %v1805 = vmul.f32 %v1773, %v1773
  %v1806 = vmul.f32 %v1774, %v1774
  %v1807 = vmul.f32 %v1775, %v1775
  %v1808 = vmul.f32 %v1776, %v1776
  %v1809 = vmul.f32 %v1777, %v1777
  %v1810 = vmul.f32 %v1778, %v1778
  %v1811 = vmul.f32 %v1779, %v1779
  %v1812 = vmul.f32 %v1780, %v1780
  %v1813 = vmul.f32 %v1781, %v1781
  %v1814 = vmul.f32 %v1782, %v1782
  %v1815 = vmul.f32 %v1783, %v1783
  %v1816 = vmul.f32 %v1784, %v1784
  %v1817 = vmul.f32 %v1785, %v1785
  %v1818 = vsub.f32 %v1786, %v1802
  %v1819 = vsub.f32 %v1787, %v1803
  %v1820 = vsub.f32 %v1788, %v1804
  %v1821 = vsub.f32 %v1789, %v1805
  %v1822 = vsub.f32 %v1790, %v1806
  %v1823 = vsub.f32 %v1791, %v1807
  %v1824 = vsub.f32 %v1792, %v1808
  %v1825 = vsub.f32 %v1793, %v1809
  %v1826 = vsub.f32 %v1794, %v1810
  %v1827 = vsub.f32 %v1795, %v1811
  %v1828 = vsub.f32 %v1796, %v1812
  %v1829 = vsub.f32 %v1797, %v1813
  %v1830 = vsub.f32 %v1798, %v1814
  %v1831 = vsub.f32 %v1799, %v1815
  %v1832 = vsub.f32 %v1800, %v1816
  %v1833 = vsub.f32 %v1801, %v1817
  %v1834 = vld [vmem:[%s2] sm:$0xff]
  %v1835 = vld [vmem:[%s2 + $0x8] sm:$0xff]
  %v1836 = vld [vmem:[%s2 + $0x10] sm:$0xff]
  %v1837 = vld [vmem:[%s2 + $0x18] sm:$0xff]
  %v1838 = vld [vmem:[%s2 + $0x20] sm:$0xff]
  %v1839 = vld [vmem:[%s2 + $0x28] sm:$0xff]
  %v1840 = vld [vmem:[%s2 + $0x30] sm:$0xff]
  %v1841 = vld [vmem:[%s2 + $0x38] sm:$0xff]
  %v1842 = vld [vmem:[%s2 + $0x40] sm:$0xff]
  %v1843 = vld [vmem:[%s2 + $0x48] sm:$0xff]
  %v1844 = vld [vmem:[%s2 + $0x50] sm:$0xff]
  %v1845 = vld [vmem:[%s2 + $0x58] sm:$0xff]
  %v1846 = vld [vmem:[%s2 + $0x60] sm:$0xff]
  %v1847 = vld [vmem:[%s2 + $0x68] sm:$0xff]
  %v1848 = vld [vmem:[%s2 + $0x70] sm:$0xff]
  %v1849 = vld [vmem:[%s2 + $0x78] sm:$0xff]
  %v1850 = vadd.f32 %v1818, 1e-05
  %v1851 = vadd.f32 %v1819, 1e-05
  %v1852 = vadd.f32 %v1820, 1e-05
  %v1853 = vadd.f32 %v1821, 1e-05
  %v1854 = vadd.f32 %v1822, 1e-05
  %v1855 = vadd.f32 %v1823, 1e-05
  %v1856 = vadd.f32 %v1824, 1e-05
  %v1857 = vadd.f32 %v1825, 1e-05
  %v1858 = vadd.f32 %v1826, 1e-05
  %v1859 = vadd.f32 %v1827, 1e-05
  %v1860 = vadd.f32 %v1828, 1e-05
  %v1861 = vadd.f32 %v1829, 1e-05
  %v1862 = vadd.f32 %v1830, 1e-05
  %v1863 = vadd.f32 %v1831, 1e-05
  %v1864 = vadd.f32 %v1832, 1e-05
  %v1865 = vadd.f32 %v1833, 1e-05
  %v1866 = vrsqrt.pop %v1850
  %v1867 = vrsqrt.pop %v1851
  %v1868 = vrsqrt.pop %v1852
  %v1869 = vrsqrt.pop %v1853
  %v1870 = vrsqrt.pop %v1854
  %v1871 = vrsqrt.pop %v1855
  %v1872 = vrsqrt.pop %v1856
  %v1873 = vrsqrt.pop %v1857
  %v1874 = vrsqrt.pop %v1858
  %v1875 = vrsqrt.pop %v1859
  %v1876 = vrsqrt.pop %v1860
  %v1877 = vrsqrt.pop %v1861
  %v1878 = vrsqrt.pop %v1862
  %v1879 = vrsqrt.pop %v1863
  %v1880 = vrsqrt.pop %v1864
  %v1881 = vrsqrt.pop %v1865
  %v1882 = vmul.f32 %v1834, %v1866
  %v1883 = vmul.f32 %v1835, %v1867
  %v1884 = vmul.f32 %v1836, %v1868
  %v1885 = vmul.f32 %v1837, %v1869
  %v1886 = vmul.f32 %v1838, %v1870
  %v1887 = vmul.f32 %v1839, %v1871
  %v1888 = vmul.f32 %v1840, %v1872
  %v1889 = vmul.f32 %v1841, %v1873
  %v1890 = vmul.f32 %v1842, %v1874
  %v1891 = vmul.f32 %v1843, %v1875
  %v1892 = vmul.f32 %v1844, %v1876
  %v1893 = vmul.f32 %v1845, %v1877
  %v1894 = vmul.f32 %v1846, %v1878
  %v1895 = vmul.f32 %v1847, %v1879
  %v1896 = vmul.f32 %v1848, %v1880
  %v1897 = vmul.f32 %v1849, %v1881
  %v1898 = vld [vmem:[%s3] sm:$0xff]
  %v1899 = vld [vmem:[%s3 + $0x8] sm:$0xff]
  %v1900 = vld [vmem:[%s3 + $0x10] sm:$0xff]
  %v1901 = vld [vmem:[%s3 + $0x18] sm:$0xff]
  %v1902 = vld [vmem:[%s3 + $0x20] sm:$0xff]
  %v1903 = vld [vmem:[%s3 + $0x28] sm:$0xff]
  %v1904 = vld [vmem:[%s3 + $0x30] sm:$0xff]
  %v1905 = vld [vmem:[%s3 + $0x38] sm:$0xff]
  %v1906 = vld [vmem:[%s3 + $0x40] sm:$0xff]
  %v1907 = vld [vmem:[%s3 + $0x48] sm:$0xff]
  %v1908 = vld [vmem:[%s3 + $0x50] sm:$0xff]
  %v1909 = vld [vmem:[%s3 + $0x58] sm:$0xff]
  %v1910 = vld [vmem:[%s3 + $0x60] sm:$0xff]
  %v1911 = vld [vmem:[%s3 + $0x68] sm:$0xff]
  %v1912 = vld [vmem:[%s3 + $0x70] sm:$0xff]
  %v1913 = vld [vmem:[%s3 + $0x78] sm:$0xff]
  %v1914 = vmul.f32 %v1770, %v1882
  %v1915 = vmul.f32 %v1771, %v1883
  %v1916 = vmul.f32 %v1772, %v1884
  %v1917 = vmul.f32 %v1773, %v1885
  %v1918 = vmul.f32 %v1774, %v1886
  %v1919 = vmul.f32 %v1775, %v1887
  %v1920 = vmul.f32 %v1776, %v1888
  %v1921 = vmul.f32 %v1777, %v1889
  %v1922 = vmul.f32 %v1778, %v1890
  %v1923 = vmul.f32 %v1779, %v1891
  %v1924 = vmul.f32 %v1780, %v1892
  %v1925 = vmul.f32 %v1781, %v1893
  %v1926 = vmul.f32 %v1782, %v1894
  %v1927 = vmul.f32 %v1783, %v1895
  %v1928 = vmul.f32 %v1784, %v1896
  %v1929 = vmul.f32 %v1785, %v1897
  %v1930 = vsub.f32 %v1898, %v1914
  %v1931 = vsub.f32 %v1899, %v1915
  %v1932 = vsub.f32 %v1900, %v1916
  %v1933 = vsub.f32 %v1901, %v1917
  %v1934 = vsub.f32 %v1902, %v1918
  %v1935 = vsub.f32 %v1903, %v1919
  %v1936 = vsub.f32 %v1904, %v1920
  %v1937 = vsub.f32 %v1905, %v1921
  %v1938 = vsub.f32 %v1906, %v1922
  %v1939 = vsub.f32 %v1907, %v1923
  %v1940 = vsub.f32 %v1908, %v1924
  %v1941 = vsub.f32 %v1909, %v1925
  %v1942 = vsub.f32 %v1910, %v1926
  %v1943 = vsub.f32 %v1911, %v1927
  %v1944 = vsub.f32 %v1912, %v1928
  %v1945 = vsub.f32 %v1913, %v1929
  %1947 = vset.pattern.permute.xlu0 0
  %1948 = vperm.xlu0 %1947, %v1882
  %v1949 = vpop.permute.xlu0 %1948
  %1952 = vset.pattern.permute.xlu0 0
  %1953 = vperm.xlu0 %1952, %v1883
  %v1954 = vpop.permute.xlu0 %1953
  %1957 = vset.pattern.permute.xlu0 0
  %1958 = vperm.xlu0 %1957, %v1884
  %v1959 = vpop.permute.xlu0 %1958
  %1962 = vset.pattern.permute.xlu0 0
  %1963 = vperm.xlu0 %1962, %v1885
  %v1964 = vpop.permute.xlu0 %1963
  %1967 = vset.pattern.permute.xlu0 0
  %1968 = vperm.xlu0 %1967, %v1886
  %v1969 = vpop.permute.xlu0 %1968
  %1972 = vset.pattern.permute.xlu0 0
  %1973 = vperm.xlu0 %1972, %v1887
  %v1974 = vpop.permute.xlu0 %1973
  %1977 = vset.pattern.permute.xlu0 0
  %1978 = vperm.xlu0 %1977, %v1888
  %v1979 = vpop.permute.xlu0 %1978
  %1982 = vset.pattern.permute.xlu0 0
  %1983 = vperm.xlu0 %1982, %v1889
  %v1984 = vpop.permute.xlu0 %1983
  %1987 = vset.pattern.permute.xlu0 0
  %1988 = vperm.xlu0 %1987, %v1890
  %v1989 = vpop.permute.xlu0 %1988
  %1992 = vset.pattern.permute.xlu0 0
  %1993 = vperm.xlu0 %1992, %v1891
  %v1994 = vpop.permute.xlu0 %1993
  %1997 = vset.pattern.permute.xlu0 0
  %1998 = vperm.xlu0 %1997, %v1892
  %v1999 = vpop.permute.xlu0 %1998
  %2002 = vset.pattern.permute.xlu0 0
  %2003 = vperm.xlu0 %2002, %v1893
  %v2004 = vpop.permute.xlu0 %2003
  %2007 = vset.pattern.permute.xlu0 0
  %2008 = vperm.xlu0 %2007, %v1894
  %v2009 = vpop.permute.xlu0 %2008
  %2012 = vset.pattern.permute.xlu0 0
  %2013 = vperm.xlu0 %2012, %v1895
  %v2014 = vpop.permute.xlu0 %2013
  %2017 = vset.pattern.permute.xlu0 0
  %2018 = vperm.xlu0 %2017, %v1896
  %v2019 = vpop.permute.xlu0 %2018
  %2022 = vset.pattern.permute.xlu0 0
  %2023 = vperm.xlu0 %2022, %v1897
  %v2024 = vpop.permute.xlu0 %2023
  %v2026 = vmul.f32 %v1595, %v1949
  %v2027 = vmul.f32 %v1598, %v1954
  %v2028 = vmul.f32 %v1603, %v1959
  %v2029 = vmul.f32 %v1606, %v1964
  %v2030 = vmul.f32 %v1611, %v1969
  %v2031 = vmul.f32 %v1614, %v1974
  %v2032 = vmul.f32 %v1619, %v1979
  %v2033 = vmul.f32 %v1622, %v1984
  %v2034 = vmul.f32 %v1627, %v1989
  %v2035 = vmul.f32 %v1630, %v1994
  %v2036 = vmul.f32 %v1635, %v1999
  %v2037 = vmul.f32 %v1638, %v2004
  %v2038 = vmul.f32 %v1643, %v2009
  %v2039 = vmul.f32 %v1646, %v2014
  %v2040 = vmul.f32 %v1651, %v2019
  %v2041 = vmul.f32 %v1654, %v2024
  %2043 = vset.pattern.permute.xlu0 0
  %2044 = vperm.xlu0 %2043, %v1930
  %v2045 = vpop.permute.xlu0 %2044
  %2048 = vset.pattern.permute.xlu0 0
  %2049 = vperm.xlu0 %2048, %v1931
  %v2050 = vpop.permute.xlu0 %2049
  %2053 = vset.pattern.permute.xlu0 0
  %2054 = vperm.xlu0 %2053, %v1932
  %v2055 = vpop.permute.xlu0 %2054
  %2058 = vset.pattern.permute.xlu0 0
  %2059 = vperm.xlu0 %2058, %v1933
  %v2060 = vpop.permute.xlu0 %2059
  %2063 = vset.pattern.permute.xlu0 0
  %2064 = vperm.xlu0 %2063, %v1934
  %v2065 = vpop.permute.xlu0 %2064
  %2068 = vset.pattern.permute.xlu0 0
  %2069 = vperm.xlu0 %2068, %v1935
  %v2070 = vpop.permute.xlu0 %2069
  %2073 = vset.pattern.permute.xlu0 0
  %2074 = vperm.xlu0 %2073, %v1936
  %v2075 = vpop.permute.xlu0 %2074
  %2078 = vset.pattern.permute.xlu0 0
  %2079 = vperm.xlu0 %2078, %v1937
  %v2080 = vpop.permute.xlu0 %2079
  %2083 = vset.pattern.permute.xlu0 0
  %2084 = vperm.xlu0 %2083, %v1938
  %v2085 = vpop.permute.xlu0 %2084
  %2088 = vset.pattern.permute.xlu0 0
  %2089 = vperm.xlu0 %2088, %v1939
  %v2090 = vpop.permute.xlu0 %2089
  %2093 = vset.pattern.permute.xlu0 0
  %2094 = vperm.xlu0 %2093, %v1940
  %v2095 = vpop.permute.xlu0 %2094
  %2098 = vset.pattern.permute.xlu0 0
  %2099 = vperm.xlu0 %2098, %v1941
  %v2100 = vpop.permute.xlu0 %2099
  %2103 = vset.pattern.permute.xlu0 0
  %2104 = vperm.xlu0 %2103, %v1942
  %v2105 = vpop.permute.xlu0 %2104
  %2108 = vset.pattern.permute.xlu0 0
  %2109 = vperm.xlu0 %2108, %v1943
  %v2110 = vpop.permute.xlu0 %2109
  %2113 = vset.pattern.permute.xlu0 0
  %2114 = vperm.xlu0 %2113, %v1944
  %v2115 = vpop.permute.xlu0 %2114
  %2118 = vset.pattern.permute.xlu0 0
  %2119 = vperm.xlu0 %2118, %v1945
  %v2120 = vpop.permute.xlu0 %2119
  %v2122 = vadd.f32 %v2026, %v2045
  %v2123 = vadd.f32 %v2027, %v2050
  %v2124 = vadd.f32 %v2028, %v2055
  %v2125 = vadd.f32 %v2029, %v2060
  %v2126 = vadd.f32 %v2030, %v2065
  %v2127 = vadd.f32 %v2031, %v2070
  %v2128 = vadd.f32 %v2032, %v2075
  %v2129 = vadd.f32 %v2033, %v2080
  %v2130 = vadd.f32 %v2034, %v2085
  %v2131 = vadd.f32 %v2035, %v2090
  %v2132 = vadd.f32 %v2036, %v2095
  %v2133 = vadd.f32 %v2037, %v2100
  %v2134 = vadd.f32 %v2038, %v2105
  %v2135 = vadd.f32 %v2039, %v2110
  %v2136 = vadd.f32 %v2040, %v2115
  %v2137 = vadd.f32 %v2041, %v2120
  %v2138 = vmax.f32 %v2122, 0.0
  %v2139 = vmax.f32 %v2123, 0.0
  %v2140 = vmax.f32 %v2124, 0.0
  %v2141 = vmax.f32 %v2125, 0.0
  %v2142 = vmax.f32 %v2126, 0.0
  %v2143 = vmax.f32 %v2127, 0.0
  %v2144 = vmax.f32 %v2128, 0.0
  %v2145 = vmax.f32 %v2129, 0.0
  %v2146 = vmax.f32 %v2130, 0.0
  %v2147 = vmax.f32 %v2131, 0.0
  %v2148 = vmax.f32 %v2132, 0.0
  %v2149 = vmax.f32 %v2133, 0.0
  %v2150 = vmax.f32 %v2134, 0.0
  %v2151 = vmax.f32 %v2135, 0.0
  %v2152 = vmax.f32 %v2136, 0.0
  %v2153 = vmax.f32 %v2137, 0.0
  %vm2154 = vcmask 531456
  %2155 = vst.msk [vmem:[#allocation2] sm:$0xff] %vm2154, 0
  %2156 = vst.msk [vmem:[#allocation2 + $0x8] sm:$0xff] %vm2154, 0
  %2157 = vst.msk [vmem:[#allocation2 + $0x10] sm:$0xff] %vm2154, 0
  %2158 = vst.msk [vmem:[#allocation2 + $0x18] sm:$0xff] %vm2154, 0
  %2159 = vst.msk [vmem:[#allocation2 + $0x20] sm:$0xff] %vm2154, 0
  %2160 = vst.msk [vmem:[#allocation2 + $0x28] sm:$0xff] %vm2154, 0
  %2161 = vst.msk [vmem:[#allocation2 + $0x30] sm:$0xff] %vm2154, 0
  %2162 = vst.msk [vmem:[#allocation2 + $0x38] sm:$0xff] %vm2154, 0
  %v2163 = vpack.c.bf16 %v2139, %v2138
  %v2164 = vpack.c.bf16 %v2141, %v2140
  %v2165 = vpack.c.bf16 %v2143, %v2142
  %v2166 = vpack.c.bf16 %v2145, %v2144
  %v2167 = vpack.c.bf16 %v2147, %v2146
  %v2168 = vpack.c.bf16 %v2149, %v2148
  %v2169 = vpack.c.bf16 %v2151, %v2150
  %v2170 = vpack.c.bf16 %v2153, %v2152
  %2179 = vrot.lane.b32.xlu0 %v2163, 8
  %v2180 = vpop.permute.xlu0 %2179
  %2181 = vrot.lane.b32.xlu0 %v2164, 8
  %v2182 = vpop.permute.xlu0 %2181
  %2183 = vrot.lane.b32.xlu0 %v2165, 8
  %v2184 = vpop.permute.xlu0 %2183
  %2185 = vrot.lane.b32.xlu0 %v2166, 8
  %v2186 = vpop.permute.xlu0 %2185
  %2187 = vrot.lane.b32.xlu0 %v2167, 8
  %v2188 = vpop.permute.xlu0 %2187
  %2189 = vrot.lane.b32.xlu0 %v2168, 8
  %v2190 = vpop.permute.xlu0 %2189
  %2191 = vrot.lane.b32.xlu0 %v2169, 8
  %v2192 = vpop.permute.xlu0 %2191
  %2193 = vrot.lane.b32.xlu0 %v2170, 8
  %v2194 = vpop.permute.xlu0 %2193
  %vm2203 = vcmask 465984
  %2204 = vst.msk [vmem:[#allocation2] sm:$0xff] %vm2203, %v2180
  %2205 = vst.msk [vmem:[#allocation2 + $0x8] sm:$0xff] %vm2203, %v2182
  %2206 = vst.msk [vmem:[#allocation2 + $0x10] sm:$0xff] %vm2203, %v2184
  %2207 = vst.msk [vmem:[#allocation2 + $0x18] sm:$0xff] %vm2203, %v2186
  %2208 = vst.msk [vmem:[#allocation2 + $0x20] sm:$0xff] %vm2203, %v2188
  %2209 = vst.msk [vmem:[#allocation2 + $0x28] sm:$0xff] %vm2203, %v2190
  %2210 = vst.msk [vmem:[#allocation2 + $0x30] sm:$0xff] %vm2203, %v2192
  %2211 = vst.msk [vmem:[#allocation2 + $0x38] sm:$0xff] %vm2203, %v2194
  %v2212 = vlaneseq
  %v2213 = vand.u32 %v2212, 127
  %vm2214 = vcmp.lt.s32.totalorder %v2213, 0
  %v2215 = vsub.s32 0, %v2213
  %v2216 = vsel %vm2214, %v2215, %v2213
  %v2217 = vmul.u32.u64.compose %v2216, 2454267026
  %v2218 = vextract.low.u32 %v2217
  %v2219 = vextract.high.u32 %v2217
  %vm2220 = vc.u32 %v2218, 2454267026
  %v2221 = vsel %vm2220, 1, 0
  %v2222 = vadd.s32 %v2219, %v2221
  %v2223 = vshrl.u32 %v2222, 2
  %v2224 = vmul.u32 %v2223, 7
  %v2225 = vsub.s32 %v2216, %v2224
  %v2226 = vsub.s32 0, %v2225
  %v2227 = vsel %vm2214, %v2226, %v2225
  %vm2228 = vcmp.ne.s32.totalorder %v2227, 0
  %vm2229 = vcmp.lt.s32.totalorder %v2227, 0
  %vm2230 = vmand %vm2229, %vm2228
  %v2231 = vadd.s32 %v2227, 7
  %v2232 = vsel %vm2230, %v2231, %v2227
  %vm2233 = vcmp.ge.s32.totalorder %v2232, 1
  %v2234 = vsel %vm2233, 1, 0
  %v2235 = vcvt.s32.f32 %v2234
  %vm2236 = vcmp.le.s32.totalorder %v2232, 5
  %v2237 = vsel %vm2236, 1, 0
  %v2238 = vcvt.s32.f32 %v2237
  %v2239 = vld [vmem:[#allocation2] sm:$0xff]
  %v2240 = vld [vmem:[#allocation2 + $0x8] sm:$0xff]
  %v2241 = vld [vmem:[#allocation2 + $0x10] sm:$0xff]
  %v2242 = vld [vmem:[#allocation2 + $0x18] sm:$0xff]
  %v2243 = vld [vmem:[#allocation2 + $0x20] sm:$0xff]
  %v2244 = vld [vmem:[#allocation2 + $0x28] sm:$0xff]
  %v2245 = vld [vmem:[#allocation2 + $0x30] sm:$0xff]
  %v2246 = vld [vmem:[#allocation2 + $0x38] sm:$0xff]
  %v2247 = vld [vmem:[%s4] sm:$0xf]
  %v2248 = vld [vmem:[%s4 + $0x4] sm:$0xf]
  %v2249 = vld [vmem:[%s4 + $0x8] sm:$0xf]
  %v2250 = vld [vmem:[%s4 + $0xc] sm:$0xf]
  %v2255 = vunpack.c.l.b16 %v2247
  %v2256 = vunpack.c.l.b16 %v2248
  %v2257 = vunpack.c.l.b16 %v2249
  %v2258 = vunpack.c.l.b16 %v2250
  %v2259 = vpack.c.b16 %v2256, %v2255
  %v2260 = vpack.c.b16 %v2258, %v2257
  %2263 = vmatprep.subr.bf16.mxu0 0
  %2264 = vmatpush1.bf16.msra.mxu0 %v2239
  %2265 = vmatprep.subr.bf16.mxu0 0
  %2266 = vmatpush1.bf16.msra.mxu0 %v2240
  %2267 = vmatprep.subr.bf16.mxu0 0
  %2268 = vmatpush1.bf16.msra.mxu0 %v2241
  %2269 = vmatprep.subr.bf16.mxu0 0
  %2270 = vmatpush1.bf16.msra.mxu0 %v2242
  %2271 = vmatprep.subr.bf16.mxu0 0
  %2272 = vmatpush1.bf16.msra.mxu0 %v2243
  %2273 = vmatprep.subr.bf16.mxu0 0
  %2274 = vmatpush1.bf16.msra.mxu0 %v2244
  %2275 = vmatprep.subr.bf16.mxu0 0
  %2276 = vmatpush1.bf16.msra.mxu0 %v2245
  %2277 = vmatprep.subr.bf16.mxu0 0
  %2278 = vmatpush1.bf16.msra.mxu0 %v2246
  %2279 = vmatprep.subr.bf16.mxu0 0
  %2280 = vmatpush1.bf16.msra.mxu0 0
  %2281 = vmatprep.subr.bf16.mxu0 0
  %2282 = vmatpush1.bf16.msra.mxu0 0
  %2283 = vmatprep.subr.bf16.mxu0 0
  %2284 = vmatpush1.bf16.msra.mxu0 0
  %2285 = vmatprep.subr.bf16.mxu0 0
  %2286 = vmatpush1.bf16.msra.mxu0 0
  %2287 = vmatprep.subr.bf16.mxu0 0
  %2288 = vmatpush1.bf16.msra.mxu0 0
  %2289 = vmatprep.subr.bf16.mxu0 0
  %2290 = vmatpush1.bf16.msra.mxu0 0
  %2291 = vmatprep.subr.bf16.mxu0 0
  %2292 = vmatpush1.bf16.msra.mxu0 0
  %2293 = vmatprep.subr.bf16.mxu0 0
  %2294 = vmatpush1.bf16.msra.mxu0 0
  %2295 = vmatprep.mubr.bf16.mxu0 0
  %2296 = vmatmul.mubr.bf16.gmra.mrb[0].mxu0 %v2259
  %v2297 = vpop.f32.mrb[0].mxu0
  %v2298 = vadd.f32 0.0, %v2297
  %v2299 = vpop.f32.mrb[0].mxu0
  %v2300 = vpop.f32.mrb[0].mxu0
  %v2301 = vadd.f32 0.0, %v2300
  %v2302 = vpop.f32.mrb[0].mxu0
  %2303 = vmatprep.mubr.bf16.mxu0 0
  %2304 = vmatmul.mubr.bf16.gmra.mrb[0].mxu0 %v2260
  %v2305 = vpop.f32.mrb[0].mxu0
  %v2306 = vadd.f32 0.0, %v2305
  %v2307 = vpop.f32.mrb[0].mxu0
  %v2308 = vpop.f32.mrb[0].mxu0
  %v2309 = vadd.f32 0.0, %v2308
  %v2310 = vpop.f32.mrb[0].mxu0
  %2311 = vdwg.mxu0
  %v2312 = vmul.f32 %v2298, %v2235
  %v2313 = vmul.f32 %v2301, %v2235
  %v2314 = vmul.f32 %v2306, %v2235
  %v2315 = vmul.f32 %v2309, %v2235
  %s2316 = scalar_lea.vmem %s4, 16
  %v2317 = vld [vmem:[%s2316] sm:$0xf]
  %v2318 = vld [vmem:[%s2316 + $0x4] sm:$0xf]
  %v2319 = vld [vmem:[%s2316 + $0x8] sm:$0xf]
  %v2320 = vld [vmem:[%s2316 + $0xc] sm:$0xf]
  %v2325 = vunpack.c.l.b16 %v2317
  %v2326 = vunpack.c.l.b16 %v2318
  %v2327 = vunpack.c.l.b16 %v2319
  %v2328 = vunpack.c.l.b16 %v2320
  %v2329 = vpack.c.b16 %v2326, %v2325
  %v2330 = vpack.c.b16 %v2328, %v2327
  %2341 = vrot.lane.b32.xlu0 %v2239, 127
  %v2342 = vpop.permute.xlu0 %2341
  %2343 = vrot.lane.b32.xlu0 %v2240, 127
  %v2344 = vpop.permute.xlu0 %2343
  %2345 = vrot.lane.b32.xlu0 %v2241, 127
  %v2346 = vpop.permute.xlu0 %2345
  %2347 = vrot.lane.b32.xlu0 %v2242, 127
  %v2348 = vpop.permute.xlu0 %2347
  %2349 = vrot.lane.b32.xlu0 %v2243, 127
  %v2350 = vpop.permute.xlu0 %2349
  %2351 = vrot.lane.b32.xlu0 %v2244, 127
  %v2352 = vpop.permute.xlu0 %2351
  %2353 = vrot.lane.b32.xlu0 %v2245, 127
  %v2354 = vpop.permute.xlu0 %2353
  %2355 = vrot.lane.b32.xlu0 %v2246, 127
  %v2356 = vpop.permute.xlu0 %2355
  %2365 = vmatprep.subr.bf16.mxu0 0
  %2366 = vmatpush1.bf16.msra.mxu0 %v2342
  %2367 = vmatprep.subr.bf16.mxu0 0
  %2368 = vmatpush1.bf16.msra.mxu0 %v2344
  %2369 = vmatprep.subr.bf16.mxu0 0
  %2370 = vmatpush1.bf16.msra.mxu0 %v2346
  %2371 = vmatprep.subr.bf16.mxu0 0
  %2372 = vmatpush1.bf16.msra.mxu0 %v2348
  %2373 = vmatprep.subr.bf16.mxu0 0
  %2374 = vmatpush1.bf16.msra.mxu0 %v2350
  %2375 = vmatprep.subr.bf16.mxu0 0
  %2376 = vmatpush1.bf16.msra.mxu0 %v2352
  %2377 = vmatprep.subr.bf16.mxu0 0
  %2378 = vmatpush1.bf16.msra.mxu0 %v2354
  %2379 = vmatprep.subr.bf16.mxu0 0
  %2380 = vmatpush1.bf16.msra.mxu0 %v2356
  %2381 = vmatprep.subr.bf16.mxu0 0
  %2382 = vmatpush1.bf16.msra.mxu0 0
  %2383 = vmatprep.subr.bf16.mxu0 0
  %2384 = vmatpush1.bf16.msra.mxu0 0
  %2385 = vmatprep.subr.bf16.mxu0 0
  %2386 = vmatpush1.bf16.msra.mxu0 0
  %2387 = vmatprep.subr.bf16.mxu0 0
  %2388 = vmatpush1.bf16.msra.mxu0 0
  %2389 = vmatprep.subr.bf16.mxu0 0
  %2390 = vmatpush1.bf16.msra.mxu0 0
  %2391 = vmatprep.subr.bf16.mxu0 0
  %2392 = vmatpush1.bf16.msra.mxu0 0
  %2393 = vmatprep.subr.bf16.mxu0 0
  %2394 = vmatpush1.bf16.msra.mxu0 0
  %2395 = vmatprep.subr.bf16.mxu0 0
  %2396 = vmatpush1.bf16.msra.mxu0 0
  %2397 = vmatprep.mubr.bf16.mxu0 0
  %2398 = vmatmul.mubr.bf16.gmra.mrb[0].mxu0 %v2329
  %v2399 = vpop.f32.mrb[0].mxu0
  %v2400 = vadd.f32 0.0, %v2399
  %v2401 = vpop.f32.mrb[0].mxu0
  %v2402 = vpop.f32.mrb[0].mxu0
  %v2403 = vadd.f32 0.0, %v2402
  %v2404 = vpop.f32.mrb[0].mxu0
  %2405 = vmatprep.mubr.bf16.mxu0 0
  %2406 = vmatmul.mubr.bf16.gmra.mrb[0].mxu0 %v2330
  %v2407 = vpop.f32.mrb[0].mxu0
  %v2408 = vadd.f32 0.0, %v2407
  %v2409 = vpop.f32.mrb[0].mxu0
  %v2410 = vpop.f32.mrb[0].mxu0
  %v2411 = vadd.f32 0.0, %v2410
  %v2412 = vpop.f32.mrb[0].mxu0
  %2413 = vdwg.mxu0
  %v2414 = vadd.f32 %v2312, %v2400
  %v2415 = vadd.f32 %v2313, %v2403
  %v2416 = vadd.f32 %v2314, %v2408
  %v2417 = vadd.f32 %v2315, %v2411
  %s2418 = scalar_lea.vmem %s4, 32
  %v2419 = vld [vmem:[%s2418] sm:$0xf]
  %v2420 = vld [vmem:[%s2418 + $0x4] sm:$0xf]
  %v2421 = vld [vmem:[%s2418 + $0x8] sm:$0xf]
  %v2422 = vld [vmem:[%s2418 + $0xc] sm:$0xf]
  %v2427 = vunpack.c.l.b16 %v2419
  %v2428 = vunpack.c.l.b16 %v2420
  %v2429 = vunpack.c.l.b16 %v2421
  %v2430 = vunpack.c.l.b16 %v2422
  %v2431 = vpack.c.b16 %v2428, %v2427
  %v2432 = vpack.c.b16 %v2430, %v2429
  %2435 = vrot.lane.b32.xlu0 %v2239, 126
  %v2436 = vpop.permute.xlu0 %2435
  %2437 = vrot.lane.b32.xlu0 %v2240, 126
  %v2438 = vpop.permute.xlu0 %2437
  %2439 = vrot.lane.b32.xlu0 %v2241, 126
  %v2440 = vpop.permute.xlu0 %2439
  %2441 = vrot.lane.b32.xlu0 %v2242, 126
  %v2442 = vpop.permute.xlu0 %2441
  %2443 = vrot.lane.b32.xlu0 %v2243, 126
  %v2444 = vpop.permute.xlu0 %2443
  %2445 = vrot.lane.b32.xlu0 %v2244, 126
  %v2446 = vpop.permute.xlu0 %2445
  %2447 = vrot.lane.b32.xlu0 %v2245, 126
  %v2448 = vpop.permute.xlu0 %2447
  %2449 = vrot.lane.b32.xlu0 %v2246, 126
  %v2450 = vpop.permute.xlu0 %2449
  %2459 = vmatprep.subr.bf16.mxu0 0
  %2460 = vmatpush1.bf16.msra.mxu0 %v2436
  %2461 = vmatprep.subr.bf16.mxu0 0
  %2462 = vmatpush1.bf16.msra.mxu0 %v2438
  %2463 = vmatprep.subr.bf16.mxu0 0
  %2464 = vmatpush1.bf16.msra.mxu0 %v2440
  %2465 = vmatprep.subr.bf16.mxu0 0
  %2466 = vmatpush1.bf16.msra.mxu0 %v2442
  %2467 = vmatprep.subr.bf16.mxu0 0
  %2468 = vmatpush1.bf16.msra.mxu0 %v2444
  %2469 = vmatprep.subr.bf16.mxu0 0
  %2470 = vmatpush1.bf16.msra.mxu0 %v2446
  %2471 = vmatprep.subr.bf16.mxu0 0
  %2472 = vmatpush1.bf16.msra.mxu0 %v2448
  %2473 = vmatprep.subr.bf16.mxu0 0
  %2474 = vmatpush1.bf16.msra.mxu0 %v2450
  %2475 = vmatprep.subr.bf16.mxu0 0
  %2476 = vmatpush1.bf16.msra.mxu0 0
  %2477 = vmatprep.subr.bf16.mxu0 0
  %2478 = vmatpush1.bf16.msra.mxu0 0
  %2479 = vmatprep.subr.bf16.mxu0 0
  %2480 = vmatpush1.bf16.msra.mxu0 0
  %2481 = vmatprep.subr.bf16.mxu0 0
  %2482 = vmatpush1.bf16.msra.mxu0 0
  %2483 = vmatprep.subr.bf16.mxu0 0
  %2484 = vmatpush1.bf16.msra.mxu0 0
  %2485 = vmatprep.subr.bf16.mxu0 0
  %2486 = vmatpush1.bf16.msra.mxu0 0
  %2487 = vmatprep.subr.bf16.mxu0 0
  %2488 = vmatpush1.bf16.msra.mxu0 0
  %2489 = vmatprep.subr.bf16.mxu0 0
  %2490 = vmatpush1.bf16.msra.mxu0 0
  %2491 = vmatprep.mubr.bf16.mxu0 0
  %2492 = vmatmul.mubr.bf16.gmra.mrb[0].mxu0 %v2431
  %v2493 = vpop.f32.mrb[0].mxu0
  %v2494 = vadd.f32 0.0, %v2493
  %v2495 = vpop.f32.mrb[0].mxu0
  %v2496 = vpop.f32.mrb[0].mxu0
  %v2497 = vadd.f32 0.0, %v2496
  %v2498 = vpop.f32.mrb[0].mxu0
  %2499 = vmatprep.mubr.bf16.mxu0 0
  %2500 = vmatmul.mubr.bf16.gmra.mrb[0].mxu0 %v2432
  %v2501 = vpop.f32.mrb[0].mxu0
  %v2502 = vadd.f32 0.0, %v2501
  %v2503 = vpop.f32.mrb[0].mxu0
  %v2504 = vpop.f32.mrb[0].mxu0
  %v2505 = vadd.f32 0.0, %v2504
  %v2506 = vpop.f32.mrb[0].mxu0
  %2507 = vdwg.mxu0
  %v2508 = vmul.f32 %v2494, %v2238
  %v2509 = vmul.f32 %v2497, %v2238
  %v2510 = vmul.f32 %v2502, %v2238
  %v2511 = vmul.f32 %v2505, %v2238
  %v2512 = vadd.f32 %v2414, %v2508
  %v2513 = vadd.f32 %v2415, %v2509
  %v2514 = vadd.f32 %v2416, %v2510
  %v2515 = vadd.f32 %v2417, %v2511
  %s2516 = scalar_lea.vmem %s4, 48
  %v2517 = vld [vmem:[%s2516] sm:$0xf]
  %v2518 = vld [vmem:[%s2516 + $0x4] sm:$0xf]
  %v2519 = vld [vmem:[%s2516 + $0x8] sm:$0xf]
  %v2520 = vld [vmem:[%s2516 + $0xc] sm:$0xf]
  %v2525 = vunpack.c.l.b16 %v2517
  %v2526 = vunpack.c.l.b16 %v2518
  %v2527 = vunpack.c.l.b16 %v2519
  %v2528 = vunpack.c.l.b16 %v2520
  %v2529 = vpack.c.b16 %v2526, %v2525
  %v2530 = vpack.c.b16 %v2528, %v2527
  %2533 = vrot.lane.b32.xlu0 %v2239, 121
  %v2534 = vpop.permute.xlu0 %2533
  %2535 = vrot.lane.b32.xlu0 %v2240, 121
  %v2536 = vpop.permute.xlu0 %2535
  %2537 = vrot.lane.b32.xlu0 %v2241, 121
  %v2538 = vpop.permute.xlu0 %2537
  %2539 = vrot.lane.b32.xlu0 %v2242, 121
  %v2540 = vpop.permute.xlu0 %2539
  %2541 = vrot.lane.b32.xlu0 %v2243, 121
  %v2542 = vpop.permute.xlu0 %2541
  %2543 = vrot.lane.b32.xlu0 %v2244, 121
  %v2544 = vpop.permute.xlu0 %2543
  %2545 = vrot.lane.b32.xlu0 %v2245, 121
  %v2546 = vpop.permute.xlu0 %2545
  %2547 = vrot.lane.b32.xlu0 %v2246, 121
  %v2548 = vpop.permute.xlu0 %2547
  %2557 = vmatprep.subr.bf16.mxu0 0
  %2558 = vmatpush1.bf16.msra.mxu0 %v2534
  %2559 = vmatprep.subr.bf16.mxu0 0
  %2560 = vmatpush1.bf16.msra.mxu0 %v2536
  %2561 = vmatprep.subr.bf16.mxu0 0
  %2562 = vmatpush1.bf16.msra.mxu0 %v2538
  %2563 = vmatprep.subr.bf16.mxu0 0
  %2564 = vmatpush1.bf16.msra.mxu0 %v2540
  %2565 = vmatprep.subr.bf16.mxu0 0
  %2566 = vmatpush1.bf16.msra.mxu0 %v2542
  %2567 = vmatprep.subr.bf16.mxu0 0
  %2568 = vmatpush1.bf16.msra.mxu0 %v2544
  %2569 = vmatprep.subr.bf16.mxu0 0
  %2570 = vmatpush1.bf16.msra.mxu0 %v2546
  %2571 = vmatprep.subr.bf16.mxu0 0
  %2572 = vmatpush1.bf16.msra.mxu0 %v2548
  %2573 = vmatprep.subr.bf16.mxu0 0
  %2574 = vmatpush1.bf16.msra.mxu0 0
  %2575 = vmatprep.subr.bf16.mxu0 0
  %2576 = vmatpush1.bf16.msra.mxu0 0
  %2577 = vmatprep.subr.bf16.mxu0 0
  %2578 = vmatpush1.bf16.msra.mxu0 0
  %2579 = vmatprep.subr.bf16.mxu0 0
  %2580 = vmatpush1.bf16.msra.mxu0 0
  %2581 = vmatprep.subr.bf16.mxu0 0
  %2582 = vmatpush1.bf16.msra.mxu0 0
  %2583 = vmatprep.subr.bf16.mxu0 0
  %2584 = vmatpush1.bf16.msra.mxu0 0
  %2585 = vmatprep.subr.bf16.mxu0 0
  %2586 = vmatpush1.bf16.msra.mxu0 0
  %2587 = vmatprep.subr.bf16.mxu0 0
  %2588 = vmatpush1.bf16.msra.mxu0 0
  %2589 = vmatprep.mubr.bf16.mxu0 0
  %2590 = vmatmul.mubr.bf16.gmra.mrb[0].mxu0 %v2529
  %v2591 = vpop.f32.mrb[0].mxu0
  %v2592 = vadd.f32 0.0, %v2591
  %v2593 = vpop.f32.mrb[0].mxu0
  %v2594 = vpop.f32.mrb[0].mxu0
  %v2595 = vadd.f32 0.0, %v2594
  %v2596 = vpop.f32.mrb[0].mxu0
  %2597 = vmatprep.mubr.bf16.mxu0 0
  %2598 = vmatmul.mubr.bf16.gmra.mrb[0].mxu0 %v2530
  %v2599 = vpop.f32.mrb[0].mxu0
  %v2600 = vadd.f32 0.0, %v2599
  %v2601 = vpop.f32.mrb[0].mxu0
  %v2602 = vpop.f32.mrb[0].mxu0
  %v2603 = vadd.f32 0.0, %v2602
  %v2604 = vpop.f32.mrb[0].mxu0
  %2605 = vdwg.mxu0
  %v2606 = vmul.f32 %v2592, %v2235
  %v2607 = vmul.f32 %v2595, %v2235
  %v2608 = vmul.f32 %v2600, %v2235
  %v2609 = vmul.f32 %v2603, %v2235
  %v2610 = vadd.f32 %v2512, %v2606
  %v2611 = vadd.f32 %v2513, %v2607
  %v2612 = vadd.f32 %v2514, %v2608
  %v2613 = vadd.f32 %v2515, %v2609
  %s2614 = scalar_lea.vmem %s4, 64
  %v2615 = vld [vmem:[%s2614] sm:$0xf]
  %v2616 = vld [vmem:[%s2614 + $0x4] sm:$0xf]
  %v2617 = vld [vmem:[%s2614 + $0x8] sm:$0xf]
  %v2618 = vld [vmem:[%s2614 + $0xc] sm:$0xf]
  %v2623 = vunpack.c.l.b16 %v2615
  %v2624 = vunpack.c.l.b16 %v2616
  %v2625 = vunpack.c.l.b16 %v2617
  %v2626 = vunpack.c.l.b16 %v2618
  %v2627 = vpack.c.b16 %v2624, %v2623
  %v2628 = vpack.c.b16 %v2626, %v2625
  %2631 = vrot.lane.b32.xlu0 %v2239, 120
  %v2632 = vpop.permute.xlu0 %2631
  %2633 = vrot.lane.b32.xlu0 %v2240, 120
  %v2634 = vpop.permute.xlu0 %2633
  %2635 = vrot.lane.b32.xlu0 %v2241, 120
  %v2636 = vpop.permute.xlu0 %2635
  %2637 = vrot.lane.b32.xlu0 %v2242, 120
  %v2638 = vpop.permute.xlu0 %2637
  %2639 = vrot.lane.b32.xlu0 %v2243, 120
  %v2640 = vpop.permute.xlu0 %2639
  %2641 = vrot.lane.b32.xlu0 %v2244, 120
  %v2642 = vpop.permute.xlu0 %2641
  %2643 = vrot.lane.b32.xlu0 %v2245, 120
  %v2644 = vpop.permute.xlu0 %2643
  %2645 = vrot.lane.b32.xlu0 %v2246, 120
  %v2646 = vpop.permute.xlu0 %2645
  %2655 = vmatprep.subr.bf16.mxu0 0
  %2656 = vmatpush1.bf16.msra.mxu0 %v2632
  %2657 = vmatprep.subr.bf16.mxu0 0
  %2658 = vmatpush1.bf16.msra.mxu0 %v2634
  %2659 = vmatprep.subr.bf16.mxu0 0
  %2660 = vmatpush1.bf16.msra.mxu0 %v2636
  %2661 = vmatprep.subr.bf16.mxu0 0
  %2662 = vmatpush1.bf16.msra.mxu0 %v2638
  %2663 = vmatprep.subr.bf16.mxu0 0
  %2664 = vmatpush1.bf16.msra.mxu0 %v2640
  %2665 = vmatprep.subr.bf16.mxu0 0
  %2666 = vmatpush1.bf16.msra.mxu0 %v2642
  %2667 = vmatprep.subr.bf16.mxu0 0
  %2668 = vmatpush1.bf16.msra.mxu0 %v2644
  %2669 = vmatprep.subr.bf16.mxu0 0
  %2670 = vmatpush1.bf16.msra.mxu0 %v2646
  %2671 = vmatprep.subr.bf16.mxu0 0
  %2672 = vmatpush1.bf16.msra.mxu0 0
  %2673 = vmatprep.subr.bf16.mxu0 0
  %2674 = vmatpush1.bf16.msra.mxu0 0
  %2675 = vmatprep.subr.bf16.mxu0 0
  %2676 = vmatpush1.bf16.msra.mxu0 0
  %2677 = vmatprep.subr.bf16.mxu0 0
  %2678 = vmatpush1.bf16.msra.mxu0 0
  %2679 = vmatprep.subr.bf16.mxu0 0
  %2680 = vmatpush1.bf16.msra.mxu0 0
  %2681 = vmatprep.subr.bf16.mxu0 0
  %2682 = vmatpush1.bf16.msra.mxu0 0
  %2683 = vmatprep.subr.bf16.mxu0 0
  %2684 = vmatpush1.bf16.msra.mxu0 0
  %2685 = vmatprep.subr.bf16.mxu0 0
  %2686 = vmatpush1.bf16.msra.mxu0 0
  %2687 = vmatprep.mubr.bf16.mxu0 0
  %2688 = vmatmul.mubr.bf16.gmra.mrb[0].mxu0 %v2627
  %v2689 = vpop.f32.mrb[0].mxu0
  %v2690 = vadd.f32 0.0, %v2689
  %v2691 = vpop.f32.mrb[0].mxu0
  %v2692 = vpop.f32.mrb[0].mxu0
  %v2693 = vadd.f32 0.0, %v2692
  %v2694 = vpop.f32.mrb[0].mxu0
  %2695 = vmatprep.mubr.bf16.mxu0 0
  %2696 = vmatmul.mubr.bf16.gmra.mrb[0].mxu0 %v2628
  %v2697 = vpop.f32.mrb[0].mxu0
  %v2698 = vadd.f32 0.0, %v2697
  %v2699 = vpop.f32.mrb[0].mxu0
  %v2700 = vpop.f32.mrb[0].mxu0
  %v2701 = vadd.f32 0.0, %v2700
  %v2702 = vpop.f32.mrb[0].mxu0
  %2703 = vdwg.mxu0
  %v2704 = vadd.f32 %v2610, %v2690
  %v2705 = vadd.f32 %v2611, %v2693
  %v2706 = vadd.f32 %v2612, %v2698
  %v2707 = vadd.f32 %v2613, %v2701
  %s2708 = scalar_lea.vmem %s4, 80
  %v2709 = vld [vmem:[%s2708] sm:$0xf]
  %v2710 = vld [vmem:[%s2708 + $0x4] sm:$0xf]
  %v2711 = vld [vmem:[%s2708 + $0x8] sm:$0xf]
  %v2712 = vld [vmem:[%s2708 + $0xc] sm:$0xf]
  %v2717 = vunpack.c.l.b16 %v2709
  %v2718 = vunpack.c.l.b16 %v2710
  %v2719 = vunpack.c.l.b16 %v2711
  %v2720 = vunpack.c.l.b16 %v2712
  %v2721 = vpack.c.b16 %v2718, %v2717
  %v2722 = vpack.c.b16 %v2720, %v2719
  %2725 = vrot.lane.b32.xlu0 %v2239, 119
  %v2726 = vpop.permute.xlu0 %2725
  %2727 = vrot.lane.b32.xlu0 %v2240, 119
  %v2728 = vpop.permute.xlu0 %2727
  %2729 = vrot.lane.b32.xlu0 %v2241, 119
  %v2730 = vpop.permute.xlu0 %2729
  %2731 = vrot.lane.b32.xlu0 %v2242, 119
  %v2732 = vpop.permute.xlu0 %2731
  %2733 = vrot.lane.b32.xlu0 %v2243, 119
  %v2734 = vpop.permute.xlu0 %2733
  %2735 = vrot.lane.b32.xlu0 %v2244, 119
  %v2736 = vpop.permute.xlu0 %2735
  %2737 = vrot.lane.b32.xlu0 %v2245, 119
  %v2738 = vpop.permute.xlu0 %2737
  %2739 = vrot.lane.b32.xlu0 %v2246, 119
  %v2740 = vpop.permute.xlu0 %2739
  %2749 = vmatprep.subr.bf16.mxu0 0
  %2750 = vmatpush1.bf16.msra.mxu0 %v2726
  %2751 = vmatprep.subr.bf16.mxu0 0
  %2752 = vmatpush1.bf16.msra.mxu0 %v2728
  %2753 = vmatprep.subr.bf16.mxu0 0
  %2754 = vmatpush1.bf16.msra.mxu0 %v2730
  %2755 = vmatprep.subr.bf16.mxu0 0
  %2756 = vmatpush1.bf16.msra.mxu0 %v2732
  %2757 = vmatprep.subr.bf16.mxu0 0
  %2758 = vmatpush1.bf16.msra.mxu0 %v2734
  %2759 = vmatprep.subr.bf16.mxu0 0
  %2760 = vmatpush1.bf16.msra.mxu0 %v2736
  %2761 = vmatprep.subr.bf16.mxu0 0
  %2762 = vmatpush1.bf16.msra.mxu0 %v2738
  %2763 = vmatprep.subr.bf16.mxu0 0
  %2764 = vmatpush1.bf16.msra.mxu0 %v2740
  %2765 = vmatprep.subr.bf16.mxu0 0
  %2766 = vmatpush1.bf16.msra.mxu0 0
  %2767 = vmatprep.subr.bf16.mxu0 0
  %2768 = vmatpush1.bf16.msra.mxu0 0
  %2769 = vmatprep.subr.bf16.mxu0 0
  %2770 = vmatpush1.bf16.msra.mxu0 0
  %2771 = vmatprep.subr.bf16.mxu0 0
  %2772 = vmatpush1.bf16.msra.mxu0 0
  %2773 = vmatprep.subr.bf16.mxu0 0
  %2774 = vmatpush1.bf16.msra.mxu0 0
  %2775 = vmatprep.subr.bf16.mxu0 0
  %2776 = vmatpush1.bf16.msra.mxu0 0
  %2777 = vmatprep.subr.bf16.mxu0 0
  %2778 = vmatpush1.bf16.msra.mxu0 0
  %2779 = vmatprep.subr.bf16.mxu0 0
  %2780 = vmatpush1.bf16.msra.mxu0 0
  %2781 = vmatprep.mubr.bf16.mxu0 0
  %2782 = vmatmul.mubr.bf16.gmra.mrb[0].mxu0 %v2721
  %v2783 = vpop.f32.mrb[0].mxu0
  %v2784 = vadd.f32 0.0, %v2783
  %v2785 = vpop.f32.mrb[0].mxu0
  %v2786 = vpop.f32.mrb[0].mxu0
  %v2787 = vadd.f32 0.0, %v2786
  %v2788 = vpop.f32.mrb[0].mxu0
  %2789 = vmatprep.mubr.bf16.mxu0 0
  %2790 = vmatmul.mubr.bf16.gmra.mrb[0].mxu0 %v2722
  %v2791 = vpop.f32.mrb[0].mxu0
  %v2792 = vadd.f32 0.0, %v2791
  %v2793 = vpop.f32.mrb[0].mxu0
  %v2794 = vpop.f32.mrb[0].mxu0
  %v2795 = vadd.f32 0.0, %v2794
  %v2796 = vpop.f32.mrb[0].mxu0
  %2797 = vdwg.mxu0
  %v2798 = vmul.f32 %v2784, %v2238
  %v2799 = vmul.f32 %v2787, %v2238
  %v2800 = vmul.f32 %v2792, %v2238
  %v2801 = vmul.f32 %v2795, %v2238
  %v2802 = vadd.f32 %v2704, %v2798
  %v2803 = vadd.f32 %v2705, %v2799
  %v2804 = vadd.f32 %v2706, %v2800
  %v2805 = vadd.f32 %v2707, %v2801
  %s2806 = scalar_lea.vmem %s4, 96
  %v2807 = vld [vmem:[%s2806] sm:$0xf]
  %v2808 = vld [vmem:[%s2806 + $0x4] sm:$0xf]
  %v2809 = vld [vmem:[%s2806 + $0x8] sm:$0xf]
  %v2810 = vld [vmem:[%s2806 + $0xc] sm:$0xf]
  %v2815 = vunpack.c.l.b16 %v2807
  %v2816 = vunpack.c.l.b16 %v2808
  %v2817 = vunpack.c.l.b16 %v2809
  %v2818 = vunpack.c.l.b16 %v2810
  %v2819 = vpack.c.b16 %v2816, %v2815
  %v2820 = vpack.c.b16 %v2818, %v2817
  %2823 = vrot.lane.b32.xlu0 %v2239, 114
  %v2824 = vpop.permute.xlu0 %2823
  %2825 = vrot.lane.b32.xlu0 %v2240, 114
  %v2826 = vpop.permute.xlu0 %2825
  %2827 = vrot.lane.b32.xlu0 %v2241, 114
  %v2828 = vpop.permute.xlu0 %2827
  %2829 = vrot.lane.b32.xlu0 %v2242, 114
  %v2830 = vpop.permute.xlu0 %2829
  %2831 = vrot.lane.b32.xlu0 %v2243, 114
  %v2832 = vpop.permute.xlu0 %2831
  %2833 = vrot.lane.b32.xlu0 %v2244, 114
  %v2834 = vpop.permute.xlu0 %2833
  %2835 = vrot.lane.b32.xlu0 %v2245, 114
  %v2836 = vpop.permute.xlu0 %2835
  %2837 = vrot.lane.b32.xlu0 %v2246, 114
  %v2838 = vpop.permute.xlu0 %2837
  %2847 = vmatprep.subr.bf16.mxu0 0
  %2848 = vmatpush1.bf16.msra.mxu0 %v2824
  %2849 = vmatprep.subr.bf16.mxu0 0
  %2850 = vmatpush1.bf16.msra.mxu0 %v2826
  %2851 = vmatprep.subr.bf16.mxu0 0
  %2852 = vmatpush1.bf16.msra.mxu0 %v2828
  %2853 = vmatprep.subr.bf16.mxu0 0
  %2854 = vmatpush1.bf16.msra.mxu0 %v2830
  %2855 = vmatprep.subr.bf16.mxu0 0
  %2856 = vmatpush1.bf16.msra.mxu0 %v2832
  %2857 = vmatprep.subr.bf16.mxu0 0
  %2858 = vmatpush1.bf16.msra.mxu0 %v2834
  %2859 = vmatprep.subr.bf16.mxu0 0
  %2860 = vmatpush1.bf16.msra.mxu0 %v2836
  %2861 = vmatprep.subr.bf16.mxu0 0
  %2862 = vmatpush1.bf16.msra.mxu0 %v2838
  %2863 = vmatprep.subr.bf16.mxu0 0
  %2864 = vmatpush1.bf16.msra.mxu0 0
  %2865 = vmatprep.subr.bf16.mxu0 0
  %2866 = vmatpush1.bf16.msra.mxu0 0
  %2867 = vmatprep.subr.bf16.mxu0 0
  %2868 = vmatpush1.bf16.msra.mxu0 0
  %2869 = vmatprep.subr.bf16.mxu0 0
  %2870 = vmatpush1.bf16.msra.mxu0 0
  %2871 = vmatprep.subr.bf16.mxu0 0
  %2872 = vmatpush1.bf16.msra.mxu0 0
  %2873 = vmatprep.subr.bf16.mxu0 0
  %2874 = vmatpush1.bf16.msra.mxu0 0
  %2875 = vmatprep.subr.bf16.mxu0 0
  %2876 = vmatpush1.bf16.msra.mxu0 0
  %2877 = vmatprep.subr.bf16.mxu0 0
  %2878 = vmatpush1.bf16.msra.mxu0 0
  %2879 = vmatprep.mubr.bf16.mxu0 0
  %2880 = vmatmul.mubr.bf16.gmra.mrb[0].mxu0 %v2819
  %v2881 = vpop.f32.mrb[0].mxu0
  %v2882 = vadd.f32 0.0, %v2881
  %v2883 = vpop.f32.mrb[0].mxu0
  %v2884 = vpop.f32.mrb[0].mxu0
  %v2885 = vadd.f32 0.0, %v2884
  %v2886 = vpop.f32.mrb[0].mxu0
  %2887 = vmatprep.mubr.bf16.mxu0 0
  %2888 = vmatmul.mubr.bf16.gmra.mrb[0].mxu0 %v2820
  %v2889 = vpop.f32.mrb[0].mxu0
  %v2890 = vadd.f32 0.0, %v2889
  %v2891 = vpop.f32.mrb[0].mxu0
  %v2892 = vpop.f32.mrb[0].mxu0
  %v2893 = vadd.f32 0.0, %v2892
  %v2894 = vpop.f32.mrb[0].mxu0
  %2895 = vdwg.mxu0
  %v2896 = vmul.f32 %v2882, %v2235
  %v2897 = vmul.f32 %v2885, %v2235
  %v2898 = vmul.f32 %v2890, %v2235
  %v2899 = vmul.f32 %v2893, %v2235
  %v2900 = vadd.f32 %v2802, %v2896
  %v2901 = vadd.f32 %v2803, %v2897
  %v2902 = vadd.f32 %v2804, %v2898
  %v2903 = vadd.f32 %v2805, %v2899
  %s2904 = scalar_lea.vmem %s4, 112
  %v2905 = vld [vmem:[%s2904] sm:$0xf]
  %v2906 = vld [vmem:[%s2904 + $0x4] sm:$0xf]
  %v2907 = vld [vmem:[%s2904 + $0x8] sm:$0xf]
  %v2908 = vld [vmem:[%s2904 + $0xc] sm:$0xf]
  %v2913 = vunpack.c.l.b16 %v2905
  %v2914 = vunpack.c.l.b16 %v2906
  %v2915 = vunpack.c.l.b16 %v2907
  %v2916 = vunpack.c.l.b16 %v2908
  %v2917 = vpack.c.b16 %v2914, %v2913
  %v2918 = vpack.c.b16 %v2916, %v2915
  %2921 = vrot.lane.b32.xlu0 %v2239, 113
  %v2922 = vpop.permute.xlu0 %2921
  %2923 = vrot.lane.b32.xlu0 %v2240, 113
  %v2924 = vpop.permute.xlu0 %2923
  %2925 = vrot.lane.b32.xlu0 %v2241, 113
  %v2926 = vpop.permute.xlu0 %2925
  %2927 = vrot.lane.b32.xlu0 %v2242, 113
  %v2928 = vpop.permute.xlu0 %2927
  %2929 = vrot.lane.b32.xlu0 %v2243, 113
  %v2930 = vpop.permute.xlu0 %2929
  %2931 = vrot.lane.b32.xlu0 %v2244, 113
  %v2932 = vpop.permute.xlu0 %2931
  %2933 = vrot.lane.b32.xlu0 %v2245, 113
  %v2934 = vpop.permute.xlu0 %2933
  %2935 = vrot.lane.b32.xlu0 %v2246, 113
  %v2936 = vpop.permute.xlu0 %2935
  %2945 = vmatprep.subr.bf16.mxu0 0
  %2946 = vmatpush1.bf16.msra.mxu0 %v2922
  %2947 = vmatprep.subr.bf16.mxu0 0
  %2948 = vmatpush1.bf16.msra.mxu0 %v2924
  %2949 = vmatprep.subr.bf16.mxu0 0
  %2950 = vmatpush1.bf16.msra.mxu0 %v2926
  %2951 = vmatprep.subr.bf16.mxu0 0
  %2952 = vmatpush1.bf16.msra.mxu0 %v2928
  %2953 = vmatprep.subr.bf16.mxu0 0
  %2954 = vmatpush1.bf16.msra.mxu0 %v2930
  %2955 = vmatprep.subr.bf16.mxu0 0
  %2956 = vmatpush1.bf16.msra.mxu0 %v2932
  %2957 = vmatprep.subr.bf16.mxu0 0
  %2958 = vmatpush1.bf16.msra.mxu0 %v2934
  %2959 = vmatprep.subr.bf16.mxu0 0
  %2960 = vmatpush1.bf16.msra.mxu0 %v2936
  %2961 = vmatprep.subr.bf16.mxu0 0
  %2962 = vmatpush1.bf16.msra.mxu0 0
  %2963 = vmatprep.subr.bf16.mxu0 0
  %2964 = vmatpush1.bf16.msra.mxu0 0
  %2965 = vmatprep.subr.bf16.mxu0 0
  %2966 = vmatpush1.bf16.msra.mxu0 0
  %2967 = vmatprep.subr.bf16.mxu0 0
  %2968 = vmatpush1.bf16.msra.mxu0 0
  %2969 = vmatprep.subr.bf16.mxu0 0
  %2970 = vmatpush1.bf16.msra.mxu0 0
  %2971 = vmatprep.subr.bf16.mxu0 0
  %2972 = vmatpush1.bf16.msra.mxu0 0
  %2973 = vmatprep.subr.bf16.mxu0 0
  %2974 = vmatpush1.bf16.msra.mxu0 0
  %2975 = vmatprep.subr.bf16.mxu0 0
  %2976 = vmatpush1.bf16.msra.mxu0 0
  %2977 = vmatprep.mubr.bf16.mxu0 0
  %2978 = vmatmul.mubr.bf16.gmra.mrb[0].mxu0 %v2917
  %v2979 = vpop.f32.mrb[0].mxu0
  %v2980 = vadd.f32 0.0, %v2979
  %v2981 = vpop.f32.mrb[0].mxu0
  %v2982 = vpop.f32.mrb[0].mxu0
  %v2983 = vadd.f32 0.0, %v2982
  %v2984 = vpop.f32.mrb[0].mxu0
  %2985 = vmatprep.mubr.bf16.mxu0 0
  %2986 = vmatmul.mubr.bf16.gmra.mrb[0].mxu0 %v2918
  %v2987 = vpop.f32.mrb[0].mxu0
  %v2988 = vadd.f32 0.0, %v2987
  %v2989 = vpop.f32.mrb[0].mxu0
  %v2990 = vpop.f32.mrb[0].mxu0
  %v2991 = vadd.f32 0.0, %v2990
  %v2992 = vpop.f32.mrb[0].mxu0
  %2993 = vdwg.mxu0
  %v2994 = vadd.f32 %v2900, %v2980
  %v2995 = vadd.f32 %v2901, %v2983
  %v2996 = vadd.f32 %v2902, %v2988
  %v2997 = vadd.f32 %v2903, %v2991
  %s2998 = scalar_lea.vmem %s4, 128
  %v2999 = vld [vmem:[%s2998] sm:$0xf]
  %v3000 = vld [vmem:[%s2998 + $0x4] sm:$0xf]
  %v3001 = vld [vmem:[%s2998 + $0x8] sm:$0xf]
  %v3002 = vld [vmem:[%s2998 + $0xc] sm:$0xf]
  %v3007 = vunpack.c.l.b16 %v2999
  %v3008 = vunpack.c.l.b16 %v3000
  %v3009 = vunpack.c.l.b16 %v3001
  %v3010 = vunpack.c.l.b16 %v3002
  %v3011 = vpack.c.b16 %v3008, %v3007
  %v3012 = vpack.c.b16 %v3010, %v3009
  %3015 = vrot.lane.b32.xlu0 %v2239, 112
  %v3016 = vpop.permute.xlu0 %3015
  %3017 = vrot.lane.b32.xlu0 %v2240, 112
  %v3018 = vpop.permute.xlu0 %3017
  %3019 = vrot.lane.b32.xlu0 %v2241, 112
  %v3020 = vpop.permute.xlu0 %3019
  %3021 = vrot.lane.b32.xlu0 %v2242, 112
  %v3022 = vpop.permute.xlu0 %3021
  %3023 = vrot.lane.b32.xlu0 %v2243, 112
  %v3024 = vpop.permute.xlu0 %3023
  %3025 = vrot.lane.b32.xlu0 %v2244, 112
  %v3026 = vpop.permute.xlu0 %3025
  %3027 = vrot.lane.b32.xlu0 %v2245, 112
  %v3028 = vpop.permute.xlu0 %3027
  %3029 = vrot.lane.b32.xlu0 %v2246, 112
  %v3030 = vpop.permute.xlu0 %3029
  %3039 = vmatprep.subr.bf16.mxu0 0
  %3040 = vmatpush1.bf16.msra.mxu0 %v3016
  %3041 = vmatprep.subr.bf16.mxu0 0
  %3042 = vmatpush1.bf16.msra.mxu0 %v3018
  %3043 = vmatprep.subr.bf16.mxu0 0
  %3044 = vmatpush1.bf16.msra.mxu0 %v3020
  %3045 = vmatprep.subr.bf16.mxu0 0
  %3046 = vmatpush1.bf16.msra.mxu0 %v3022
  %3047 = vmatprep.subr.bf16.mxu0 0
  %3048 = vmatpush1.bf16.msra.mxu0 %v3024
  %3049 = vmatprep.subr.bf16.mxu0 0
  %3050 = vmatpush1.bf16.msra.mxu0 %v3026
  %3051 = vmatprep.subr.bf16.mxu0 0
  %3052 = vmatpush1.bf16.msra.mxu0 %v3028
  %3053 = vmatprep.subr.bf16.mxu0 0
  %3054 = vmatpush1.bf16.msra.mxu0 %v3030
  %3055 = vmatprep.subr.bf16.mxu0 0
  %3056 = vmatpush1.bf16.msra.mxu0 0
  %3057 = vmatprep.subr.bf16.mxu0 0
  %3058 = vmatpush1.bf16.msra.mxu0 0
  %3059 = vmatprep.subr.bf16.mxu0 0
  %3060 = vmatpush1.bf16.msra.mxu0 0
  %3061 = vmatprep.subr.bf16.mxu0 0
  %3062 = vmatpush1.bf16.msra.mxu0 0
  %3063 = vmatprep.subr.bf16.mxu0 0
  %3064 = vmatpush1.bf16.msra.mxu0 0
  %3065 = vmatprep.subr.bf16.mxu0 0
  %3066 = vmatpush1.bf16.msra.mxu0 0
  %3067 = vmatprep.subr.bf16.mxu0 0
  %3068 = vmatpush1.bf16.msra.mxu0 0
  %3069 = vmatprep.subr.bf16.mxu0 0
  %3070 = vmatpush1.bf16.msra.mxu0 0
  %3071 = vmatprep.mubr.bf16.mxu0 0
  %3072 = vmatmul.mubr.bf16.gmra.mrb[0].mxu0 %v3011
  %v3073 = vpop.f32.mrb[0].mxu0
  %v3074 = vadd.f32 0.0, %v3073
  %v3075 = vpop.f32.mrb[0].mxu0
  %v3076 = vpop.f32.mrb[0].mxu0
  %v3077 = vadd.f32 0.0, %v3076
  %v3078 = vpop.f32.mrb[0].mxu0
  %3079 = vmatprep.mubr.bf16.mxu0 0
  %3080 = vmatmul.mubr.bf16.gmra.mrb[0].mxu0 %v3012
  %v3081 = vpop.f32.mrb[0].mxu0
  %v3082 = vadd.f32 0.0, %v3081
  %v3083 = vpop.f32.mrb[0].mxu0
  %v3084 = vpop.f32.mrb[0].mxu0
  %v3085 = vadd.f32 0.0, %v3084
  %v3086 = vpop.f32.mrb[0].mxu0
  %3087 = vdwg.mxu0
  %v3088 = vmul.f32 %v3074, %v2238
  %v3089 = vmul.f32 %v3077, %v2238
  %v3090 = vmul.f32 %v3082, %v2238
  %v3091 = vmul.f32 %v3085, %v2238
  %v3092 = vadd.f32 %v2994, %v3088
  %v3093 = vadd.f32 %v2995, %v3089
  %v3094 = vadd.f32 %v2996, %v3090
  %v3095 = vadd.f32 %v2997, %v3091
  %3096 = vst.msk [vmem:[%s5] sm:$0xff] %vm1657, %v3092
  %3097 = vst.msk [vmem:[%s5 + $0x8] sm:$0xff] %vm1657, %v3093
  %3098 = vst.msk [vmem:[%s5 + $0x10] sm:$0xff] %vm1657, %v3094
  %3099 = vst.msk [vmem:[%s5 + $0x18] sm:$0xff] %vm1657, %v3095
  // Predicated region
  $region22: #{model_forward.1} parent=0 // pred_check
    _
  $region23: #{model_forward.1} parent=0 // pred_check_branch
    %3101 = sbr.rel (0) target = $region25
  $region24: #{model_forward.1} parent=0 // pred_region
    _
  $region25: #{model_forward.1} parent=0 // pred_fallthru
    _
  // Predicated region
  $region26: #{model_forward.1} parent=0 // pred_check
    _
  $region27: #{model_forward.1} parent=0 // pred_check_branch
    %3103 = sbr.rel (0) target = $region29
  $region28: #{model_forward.1} parent=0 // pred_region
    _
  $region29: #{model_forward.1} parent=0 // pred_fallthru
    _

</llo_original>
